<compile_context>
chip_gen: v6e
topology: v6e:2x2x1
jax: 0.10.0
libtpu: 0.0.40
codegen_flags: <defaults>
</compile_context>

<pallas_src>
import functools
import math

import jax
import jax.numpy as jnp
from jax.experimental import pallas as pl
from jax.experimental.pallas import tpu as pltpu

# ----------------------- small synthetic BERT config -----------------------
B = 2          # batch
S = 8          # sequence length
V = 50         # vocab size
P = 16         # max positions
D = 32         # hidden size ("dim" in the module, 768 in real BERT)
NH = 4         # attention heads
HD = D // NH   # head dim
FF = 64        # FFN intermediate size
L = 2          # transformer layers
NC = 16        # num_classes ("hidden" of the MLP projection)
LN_EPS = 1e-12


# ------------------------------- kernel -------------------------------------
def fused_kernel(h_ref, bias_ref, maskf_ref, eg_ref, eb_ref,
                 wqkv_ref, bqkv_ref, wo_ref, bo_ref,
                 ln1g_ref, ln1b_ref, fw1_ref, fb1_ref, fw2_ref, fb2_ref,
                 ln2g_ref, ln2b_ref,
                 pw1_ref, pb1_ref, pw2_ref, pb2_ref,
                 o_ref, res_ref, *, nh, eps):
    """Grid = (batch, layer). One full encoder layer per step; residual stream
    is VMEM-resident in `res_ref` across the layer axis."""
    l = pl.program_id(1)
    n_layers = pl.num_programs(1)

    def layernorm(x, g, b):
        mu = jnp.mean(x, axis=-1, keepdims=True)
        var = jnp.mean((x - mu) ** 2, axis=-1, keepdims=True)
        return (x - mu) * jax.lax.rsqrt(var + eps) * g + b

    # ---- l == 0: load embeddings into the residual stream (+ embedding LN) ----
    @pl.when(l == 0)
    def _():
        res_ref[...] = layernorm(h_ref[0], eg_ref[...], eb_ref[...])

    h = res_ref[...]                                   # (S, D) f32
    h_bf = h.astype(jnp.bfloat16)                      # bf16 MXU operand
    bias = bias_ref[0]                                 # (1, S) additive mask, f32
    d_ = h.shape[-1]
    hd = d_ // nh

    # ---- fused QKV projection: one deep-K matmul, (S, 3D) output ----
    qkv = jnp.dot(h_bf, wqkv_ref[0],
                  preferred_element_type=jnp.float32) + bqkv_ref[0]

    # ---- per-head attention (NH unrolled at trace time) ----
    ctx_parts = []
    for head in range(nh):
        q = qkv[:, head * hd:(head + 1) * hd]                       # scale folded into wq
        k = qkv[:, d_ + head * hd:d_ + (head + 1) * hd]
        v = qkv[:, 2 * d_ + head * hd:2 * d_ + (head + 1) * hd]
        sc = jax.lax.dot_general(q.astype(jnp.bfloat16), k.astype(jnp.bfloat16),
                                 (((1,), (1,)), ((), ())),
                                 preferred_element_type=jnp.float32)  # (S, S)
        sc = sc + bias                                  # f32 softmax path
        sc = sc - jnp.max(sc, axis=-1, keepdims=True)
        p = jnp.exp(sc)
        p = p * pl.reciprocal(jnp.sum(p, axis=-1, keepdims=True), approx=True)
        ctx_parts.append(jnp.dot(p.astype(jnp.bfloat16), v.astype(jnp.bfloat16),
                                 preferred_element_type=jnp.float32))  # (S, HD)
    ctx = jnp.concatenate(ctx_parts, axis=-1)           # (S, D) concat-heads

    # ---- output projection: single K=D contraction ----
    attn = jnp.dot(ctx.astype(jnp.bfloat16), wo_ref[0],
                   preferred_element_type=jnp.float32) + bo_ref[0]

    # ---- residual + LayerNorm 1 ----
    h1 = layernorm(attn + h, ln1g_ref[0], ln1b_ref[0])

    # ---- feed-forward (w1 -> gelu -> w2) + residual + LayerNorm 2 ----
    ff = jnp.dot(h1.astype(jnp.bfloat16), fw1_ref[0],
                 preferred_element_type=jnp.float32) + fb1_ref[0]
    # TODO(synk): HF BERT uses exact erf GELU; tanh approximation used here.
    ff = jax.nn.gelu(ff)
    ff = jnp.dot(ff.astype(jnp.bfloat16), fw2_ref[0],
                 preferred_element_type=jnp.float32) + fb2_ref[0]
    h2 = layernorm(ff + h1, ln2g_ref[0], ln2b_ref[0])
    res_ref[...] = h2                                   # carry to next layer

    # ---- l == L-1: masked mean-pooling + MLP projection ----
    @pl.when(l == n_layers - 1)
    def _():
        m = maskf_ref[0]                                # (S, 1) float mask
        summed = jnp.sum(h2 * m, axis=0, keepdims=True)            # (1, D)
        denom = jnp.maximum(jnp.sum(m, axis=0, keepdims=True), 1e-9)
        emb = summed / denom                            # exact division (1 row)
        pj = jnp.dot(emb.astype(jnp.bfloat16), pw1_ref[...],
                     preferred_element_type=jnp.float32) + pb1_ref[...]
        pj = jnp.maximum(pj, 0.0)                       # ReLU
        o_ref[0] = jnp.dot(pj.astype(jnp.bfloat16), pw2_ref[...],
                           preferred_element_type=jnp.float32) + pb2_ref[...]


# ------------------------------ wrapper --------------------------------------
def pallas_sbert(h, bias, maskf, params):
    b_, s_, d_ = h.shape
    l_ = params["wqkv"].shape[0]
    ff = params["w1"].shape[2]
    nc = params["proj_w1"].shape[1]

    def batch_spec(blk):   # indexed by the batch grid coordinate
        return pl.BlockSpec(blk, lambda b, l: (b,) + (0,) * (len(blk) - 1))

    def layer_spec(blk):   # indexed by the layer grid coordinate
        return pl.BlockSpec(blk, lambda b, l: (l,) + (0,) * (len(blk) - 1))

    def const_spec(blk):   # same block for every grid step
        return pl.BlockSpec(blk, lambda b, l: (0,) * len(blk))

    kern = functools.partial(fused_kernel, nh=NH, eps=LN_EPS)
    return pl.pallas_call(
        kern,
        grid=(b_, l_),
        out_shape=jax.ShapeDtypeStruct((b_, 1, nc), jnp.float32),
        in_specs=[
            batch_spec((1, s_, d_)),        # embedded tokens (pre-LN)
            batch_spec((1, 1, s_)),         # additive attention-mask bias (f32)
            batch_spec((1, s_, 1)),         # float mask for mean pooling
            const_spec((1, d_)),            # emb_ln gamma
            const_spec((1, d_)),            # emb_ln beta
            layer_spec((1, d_, 3 * d_)),    # wqkv  (bf16, fused slab)
            layer_spec((1, 1, 3 * d_)),     # bqkv  (f32)
            layer_spec((1, d_, d_)),        # wo    (bf16)
            layer_spec((1, 1, d_)),         # bo
            layer_spec((1, 1, d_)),         # ln1 gamma
            layer_spec((1, 1, d_)),         # ln1 beta
            layer_spec((1, d_, ff)),        # w1    (bf16)
            layer_spec((1, 1, ff)),         # b1
            layer_spec((1, ff, d_)),        # w2    (bf16)
            layer_spec((1, 1, d_)),         # b2
            layer_spec((1, 1, d_)),         # ln2 gamma
            layer_spec((1, 1, d_)),         # ln2 beta
            const_spec((d_, nc)),           # proj w1 (bf16)
            const_spec((1, nc)),            # proj b1
            const_spec((nc, nc)),           # proj w2 (bf16)
            const_spec((1, nc)),            # proj b2
        ],
        out_specs=pl.BlockSpec((1, 1, nc), lambda b, l: (b, 0, 0)),
        scratch_shapes=[pltpu.VMEM((s_, d_), jnp.float32)],   # residual stream
        compiler_params=pltpu.CompilerParams(
            dimension_semantics=("parallel", "arbitrary"),
            vmem_limit_bytes=64 * 1024 * 1024),
    )(h, bias, maskf, params["emb_ln_g"], params["emb_ln_b"],
      params["wqkv"], params["bqkv"], params["wo"], params["bo"],
      params["ln1_g"], params["ln1_b"], params["w1"], params["b1"],
      params["w2"], params["b2"], params["ln2_g"], params["ln2_b"],
      params["proj_w1"], params["proj_b1"], params["proj_w2"], params["proj_b2"])


# --------------------------- parameter init ---------------------------------
def init_params(key):
    def nrm(k, shape):
        return (0.02 * jax.random.normal(k, shape)).astype(jnp.float32)

    keys = jax.random.split(key, 5 + 6 * L)
    it = iter(keys)

    params = {
        "word_emb": nrm(next(it), (V, D)),
        "pos_emb": nrm(next(it), (P, D)),
        "type_emb": nrm(next(it), (2, D)),
        "emb_ln_g": jnp.ones((1, D), jnp.float32),
        "emb_ln_b": jnp.zeros((1, D), jnp.float32),
        # MLP projection (Linear(D, NC) -> ReLU -> Linear(NC, NC))
        "proj_w1": nrm(next(it), (D, NC)).astype(jnp.bfloat16),
        "proj_b1": jnp.zeros((1, NC), jnp.float32),
        "proj_w2": nrm(next(it), (NC, NC)).astype(jnp.bfloat16),
        "proj_b2": jnp.zeros((1, NC), jnp.float32),
    }

    scale = 1.0 / math.sqrt(HD)
    wqkv, bqkv, wo, bo = [], [], [], []
    ln1g, ln1b, w1, b1, w2, b2, ln2g, ln2b = ([] for _ in range(8))
    for _ in range(L):
        wq, wk, wv = (nrm(next(it), (D, D)) for _ in range(3))
        bq = bk = bv = jnp.zeros((D,), jnp.float32)
        # fold the 1/sqrt(head_dim) attention scale into the query projection
        wq, bq = wq * scale, bq * scale
        wqkv.append(jnp.concatenate([wq, wk, wv], axis=1))       # (D, 3D)
        bqkv.append(jnp.concatenate([bq, bk, bv])[None, :])      # (1, 3D)
        wo.append(nrm(next(it), (D, D)))                         # (D, D)
        bo.append(jnp.zeros((1, D), jnp.float32))
        ln1g.append(jnp.ones((1, D), jnp.float32))
        ln1b.append(jnp.zeros((1, D), jnp.float32))
        w1.append(nrm(next(it), (D, FF)))
        b1.append(jnp.zeros((1, FF), jnp.float32))
        w2.append(nrm(next(it), (FF, D)))
        b2.append(jnp.zeros((1, D), jnp.float32))
        ln2g.append(jnp.ones((1, D), jnp.float32))
        ln2b.append(jnp.zeros((1, D), jnp.float32))

    params.update({
        "wqkv": jnp.stack(wqkv).astype(jnp.bfloat16),   # (L, D, 3D) bf16
        "bqkv": jnp.stack(bqkv),                        # (L, 1, 3D) f32
        "wo": jnp.stack(wo).astype(jnp.bfloat16),       # (L, D, D)  bf16
        "bo": jnp.stack(bo),
        "ln1_g": jnp.stack(ln1g), "ln1_b": jnp.stack(ln1b),
        "w1": jnp.stack(w1).astype(jnp.bfloat16),       # (L, D, FF) bf16
        "b1": jnp.stack(b1),
        "w2": jnp.stack(w2).astype(jnp.bfloat16),       # (L, FF, D) bf16
        "b2": jnp.stack(b2),
        "ln2_g": jnp.stack(ln2g), "ln2_b": jnp.stack(ln2b),
    })
    return params


# ------------------------------ forward -------------------------------------
@jax.jit
def sbert_forward(x, params):
    """x: int32 [B, 2, S]; x[:,0]=input_ids, x[:,1]=attention_mask."""
    input_ids = x[:, 0]                                  # (B, S)
    attention_mask = x[:, 1].astype(jnp.float32)         # (B, S)
    b_, s_ = input_ids.shape

    # TODO(synk): embedding-table gathers stay in XLA glue (no clean Pallas
    # equivalent worth a manual DMA gather at these shapes).
    # token_type_ids assumed all-zero (SBERT single-sentence inputs).
    h = (params["word_emb"][input_ids]
         + params["pos_emb"][:s_][None, :, :]
         + params["type_emb"][0][None, None, :])         # (B, S, D) f32

    # Additive attention-mask bias, kept in f32 (never cast to bf16).
    bias = ((1.0 - attention_mask) * -1e9)[:, None, :]   # (B, 1, S)
    maskf = attention_mask[:, :, None]                   # (B, S, 1)

    out = pallas_sbert(h, bias, maskf, params)           # (B, 1, NC)
    return out[:, 0, :]                                  # (B, NC)


# ------------------------------- main ----------------------------------------
if __name__ == "__main__":
    root = jax.random.PRNGKey(0)
    k_param, k_ids = jax.random.split(root)
    params = init_params(k_param)

    input_ids = jax.random.randint(k_ids, (B, S), 0, V, dtype=jnp.int32)
    attention_mask = jnp.ones((B, S), jnp.int32)
    attention_mask = attention_mask.at[1, S - 3:].set(0)   # some padding in row 1
    x = jnp.stack([input_ids, attention_mask], axis=1)     # (B, 2, S) int32

    out = sbert_forward(x, params)
    out = jax.block_until_ready(out)
    assert out.shape == (B, NC) and out.dtype == jnp.float32
    print("KERNEL_OK")
</pallas_src>

<mosaic_0001>
module attributes {stable_mosaic.version = 11 : i64} {
  func.func @fused_kernel(%arg0: i32, %arg1: i32, %arg2: memref<1x8x32xf32, #tpu.memory_space<vmem>>, %arg3: memref<1x1x8xf32, #tpu.memory_space<vmem>>, %arg4: memref<1x8x1xf32, #tpu.memory_space<vmem>>, %arg5: memref<1x32xf32, #tpu.memory_space<vmem>>, %arg6: memref<1x32xf32, #tpu.memory_space<vmem>>, %arg7: memref<1x32x96xbf16, #tpu.memory_space<vmem>>, %arg8: memref<1x1x96xf32, #tpu.memory_space<vmem>>, %arg9: memref<1x32x32xbf16, #tpu.memory_space<vmem>>, %arg10: memref<1x1x32xf32, #tpu.memory_space<vmem>>, %arg11: memref<1x1x32xf32, #tpu.memory_space<vmem>>, %arg12: memref<1x1x32xf32, #tpu.memory_space<vmem>>, %arg13: memref<1x32x64xbf16, #tpu.memory_space<vmem>>, %arg14: memref<1x1x64xf32, #tpu.memory_space<vmem>>, %arg15: memref<1x64x32xbf16, #tpu.memory_space<vmem>>, %arg16: memref<1x1x32xf32, #tpu.memory_space<vmem>>, %arg17: memref<1x1x32xf32, #tpu.memory_space<vmem>>, %arg18: memref<1x1x32xf32, #tpu.memory_space<vmem>>, %arg19: memref<32x16xbf16, #tpu.memory_space<vmem>>, %arg20: memref<1x16xf32, #tpu.memory_space<vmem>>, %arg21: memref<16x16xbf16, #tpu.memory_space<vmem>>, %arg22: memref<1x16xf32, #tpu.memory_space<vmem>>, %arg23: memref<1x1x16xf32, #tpu.memory_space<vmem>>, %arg24: memref<8x32xf32, #tpu.memory_space<vmem>>) attributes {dimension_semantics = [#tpu.dimension_semantics<parallel>, #tpu.dimension_semantics<arbitrary>], iteration_bounds = array<i64: 2, 2>, scalar_prefetch = 0 : i64, scratch_operands = 1 : i64, tpu.core_type = #tpu.core_type<tc>, window_params = [{transform_indices = @transform_0, window_bounds = array<i64: 1, 8, 32>}, {transform_indices = @transform_1, window_bounds = array<i64: 1, 1, 8>}, {transform_indices = @transform_2, window_bounds = array<i64: 1, 8, 1>}, {pipeline_mode = #tpu.pipeline_mode<synchronous>, transform_indices = @transform_3, window_bounds = array<i64: 1, 32>}, {pipeline_mode = #tpu.pipeline_mode<synchronous>, transform_indices = @transform_4, window_bounds = array<i64: 1, 32>}, {transform_indices = @transform_5, window_bounds = array<i64: 1, 32, 96>}, {transform_indices = @transform_6, window_bounds = array<i64: 1, 1, 96>}, {transform_indices = @transform_7, window_bounds = array<i64: 1, 32, 32>}, {transform_indices = @transform_8, window_bounds = array<i64: 1, 1, 32>}, {transform_indices = @transform_9, window_bounds = array<i64: 1, 1, 32>}, {transform_indices = @transform_10, window_bounds = array<i64: 1, 1, 32>}, {transform_indices = @transform_11, window_bounds = array<i64: 1, 32, 64>}, {transform_indices = @transform_12, window_bounds = array<i64: 1, 1, 64>}, {transform_indices = @transform_13, window_bounds = array<i64: 1, 64, 32>}, {transform_indices = @transform_14, window_bounds = array<i64: 1, 1, 32>}, {transform_indices = @transform_15, window_bounds = array<i64: 1, 1, 32>}, {transform_indices = @transform_16, window_bounds = array<i64: 1, 1, 32>}, {pipeline_mode = #tpu.pipeline_mode<synchronous>, transform_indices = @transform_17, window_bounds = array<i64: 32, 16>}, {pipeline_mode = #tpu.pipeline_mode<synchronous>, transform_indices = @transform_18, window_bounds = array<i64: 1, 16>}, {pipeline_mode = #tpu.pipeline_mode<synchronous>, transform_indices = @transform_19, window_bounds = array<i64: 16, 16>}, {pipeline_mode = #tpu.pipeline_mode<synchronous>, transform_indices = @transform_20, window_bounds = array<i64: 1, 16>}, {transform_indices = @transform_21, window_bounds = array<i64: 1, 1, 16>}]} {
    %c0_i32 = arith.constant 0 : i32
    %0 = arith.cmpi eq, %arg1, %c0_i32 : i32
    %1 = arith.extui %0 : i1 to i32
    %c0_i32_0 = arith.constant 0 : i32
    %2 = arith.cmpi ne, %1, %c0_i32_0 : i32
    scf.if %2 {
      %c0_77 = arith.constant 0 : index
      %c0_78 = arith.constant 0 : index
      %c0_79 = arith.constant 0 : index
      %194 = vector.load %arg2[%c0_77, %c0_78, %c0_79] : memref<1x8x32xf32, #tpu.memory_space<vmem>>, vector<1x8x32xf32>
      %195 = vector.shape_cast %194 : vector<1x8x32xf32> to vector<8x32xf32>
      %c0_80 = arith.constant 0 : index
      %c0_81 = arith.constant 0 : index
      %196 = vector.load %arg5[%c0_80, %c0_81] : memref<1x32xf32, #tpu.memory_space<vmem>>, vector<1x32xf32>
      %c0_82 = arith.constant 0 : index
      %c0_83 = arith.constant 0 : index
      %197 = vector.load %arg6[%c0_82, %c0_83] : memref<1x32xf32, #tpu.memory_space<vmem>>, vector<1x32xf32>
      %cst_84 = arith.constant dense<0.000000e+00> : vector<8xf32>
      %198 = vector.multi_reduction <add>, %195, %cst_84 [1] : vector<8x32xf32> to vector<8xf32>
      %199 = vector.shape_cast %198 : vector<8xf32> to vector<8x1xf32>
      %cst_85 = arith.constant 3.200000e+01 : f32
      %200 = vector.broadcast %cst_85 : f32 to vector<8x1xf32>
      %201 = arith.divf %199, %200 : vector<8x1xf32>
      %202 = vector.broadcast %201 : vector<8x1xf32> to vector<8x32xf32>
      %203 = arith.subf %195, %202 : vector<8x32xf32>
      %204 = arith.mulf %203, %203 : vector<8x32xf32>
      %cst_86 = arith.constant dense<0.000000e+00> : vector<8xf32>
      %205 = vector.multi_reduction <add>, %204, %cst_86 [1] : vector<8x32xf32> to vector<8xf32>
      %206 = vector.shape_cast %205 : vector<8xf32> to vector<8x1xf32>
      %cst_87 = arith.constant 3.200000e+01 : f32
      %207 = vector.broadcast %cst_87 : f32 to vector<8x1xf32>
      %208 = arith.divf %206, %207 : vector<8x1xf32>
      %209 = vector.broadcast %201 : vector<8x1xf32> to vector<8x32xf32>
      %210 = arith.subf %195, %209 : vector<8x32xf32>
      %cst_88 = arith.constant 9.99999996E-13 : f32
      %211 = vector.broadcast %cst_88 : f32 to vector<8x1xf32>
      %212 = arith.addf %208, %211 : vector<8x1xf32>
      %213 = math.rsqrt %212 : vector<8x1xf32>
      %214 = vector.broadcast %213 : vector<8x1xf32> to vector<8x32xf32>
      %215 = arith.mulf %210, %214 : vector<8x32xf32>
      %216 = vector.broadcast %196 : vector<1x32xf32> to vector<8x32xf32>
      %217 = arith.mulf %215, %216 : vector<8x32xf32>
      %218 = vector.broadcast %197 : vector<1x32xf32> to vector<8x32xf32>
      %219 = arith.addf %217, %218 : vector<8x32xf32>
      %c0_89 = arith.constant 0 : index
      %c0_90 = arith.constant 0 : index
      %220 = vector.load %arg24[%c0_89, %c0_90] : memref<8x32xf32, #tpu.memory_space<vmem>>, vector<8x32xf32>
      tpu.vector_store %arg24[%c0_89, %c0_90], %219 {strides = array<i32>} : memref<8x32xf32, #tpu.memory_space<vmem>>, vector<8x32xf32>,
    } else {
    }
    %c0 = arith.constant 0 : index
    %c0_1 = arith.constant 0 : index
    %3 = vector.load %arg24[%c0, %c0_1] : memref<8x32xf32, #tpu.memory_space<vmem>>, vector<8x32xf32>
    %4 = arith.truncf %3 : vector<8x32xf32> to vector<8x32xbf16>
    %c0_2 = arith.constant 0 : index
    %c0_3 = arith.constant 0 : index
    %c0_4 = arith.constant 0 : index
    %5 = vector.load %arg3[%c0_2, %c0_3, %c0_4] : memref<1x1x8xf32, #tpu.memory_space<vmem>>, vector<1x1x8xf32>
    %6 = vector.shape_cast %5 : vector<1x1x8xf32> to vector<1x8xf32>
    %c0_5 = arith.constant 0 : index
    %c0_6 = arith.constant 0 : index
    %c0_7 = arith.constant 0 : index
    %7 = vector.load %arg7[%c0_5, %c0_6, %c0_7] : memref<1x32x96xbf16, #tpu.memory_space<vmem>>, vector<1x32x96xbf16>
    %8 = vector.shape_cast %7 : vector<1x32x96xbf16> to vector<32x96xbf16>
    %cst = arith.constant dense<0.000000e+00> : vector<8x96xf32>
    %9 = tpu.matmul %4, %8, %cst {dimension_numbers = #tpu.dot_dimension_numbers<[1], [0], [0], [1], [0, 0, 1, 1], [], []>} : vector<8x32xbf16>, vector<32x96xbf16>, vector<8x96xf32> -> vector<8x96xf32>
    %c0_8 = arith.constant 0 : index
    %c0_9 = arith.constant 0 : index
    %c0_10 = arith.constant 0 : index
    %10 = vector.load %arg8[%c0_8, %c0_9, %c0_10] : memref<1x1x96xf32, #tpu.memory_space<vmem>>, vector<1x1x96xf32>
    %11 = vector.shape_cast %10 : vector<1x1x96xf32> to vector<1x96xf32>
    %12 = vector.broadcast %11 : vector<1x96xf32> to vector<8x96xf32>
    %13 = arith.addf %9, %12 : vector<8x96xf32>
    %14 = vector.extract_strided_slice %13 {offsets = [0, 0], sizes = [8, 8], strides = [1, 1]} : vector<8x96xf32> to vector<8x8xf32>
    %15 = vector.extract_strided_slice %13 {offsets = [0, 32], sizes = [8, 8], strides = [1, 1]} : vector<8x96xf32> to vector<8x8xf32>
    %16 = vector.extract_strided_slice %13 {offsets = [0, 64], sizes = [8, 8], strides = [1, 1]} : vector<8x96xf32> to vector<8x8xf32>
    %17 = arith.truncf %14 : vector<8x8xf32> to vector<8x8xbf16>
    %18 = arith.truncf %15 : vector<8x8xf32> to vector<8x8xbf16>
    %cst_11 = arith.constant dense<0.000000e+00> : vector<8x8xf32>
    %19 = tpu.matmul %17, %18, %cst_11 {dimension_numbers = #tpu.dot_dimension_numbers<[1], [1], [0], [0], [0, 0, 1, 0], [], []>} : vector<8x8xbf16>, vector<8x8xbf16>, vector<8x8xf32> -> vector<8x8xf32>
    %20 = vector.broadcast %6 : vector<1x8xf32> to vector<8x8xf32>
    %21 = arith.addf %19, %20 : vector<8x8xf32>
    %cst_12 = arith.constant dense<0xFF800000> : vector<8xf32>
    %22 = vector.multi_reduction <maximumf>, %21, %cst_12 [1] : vector<8x8xf32> to vector<8xf32>
    %23 = vector.shape_cast %22 : vector<8xf32> to vector<8x1xf32>
    %24 = vector.broadcast %23 : vector<8x1xf32> to vector<8x8xf32>
    %25 = arith.subf %21, %24 : vector<8x8xf32>
    %26 = math.exp %25 : vector<8x8xf32>
    %cst_13 = arith.constant dense<0.000000e+00> : vector<8xf32>
    %27 = vector.multi_reduction <add>, %26, %cst_13 [1] : vector<8x8xf32> to vector<8xf32>
    %28 = vector.shape_cast %27 : vector<8xf32> to vector<8x1xf32>
    %29 = tpu.reciprocal %28 {approx = true} : vector<8x1xf32> -> vector<8x1xf32>
    %30 = vector.broadcast %29 : vector<8x1xf32> to vector<8x8xf32>
    %31 = arith.mulf %26, %30 : vector<8x8xf32>
    %32 = arith.truncf %31 : vector<8x8xf32> to vector<8x8xbf16>
    %33 = arith.truncf %16 : vector<8x8xf32> to vector<8x8xbf16>
    %cst_14 = arith.constant dense<0.000000e+00> : vector<8x8xf32>
    %34 = tpu.matmul %32, %33, %cst_14 {dimension_numbers = #tpu.dot_dimension_numbers<[1], [0], [0], [1], [0, 0, 1, 1], [], []>} : vector<8x8xbf16>, vector<8x8xbf16>, vector<8x8xf32> -> vector<8x8xf32>
    %35 = vector.extract_strided_slice %13 {offsets = [0, 8], sizes = [8, 8], strides = [1, 1]} : vector<8x96xf32> to vector<8x8xf32>
    %36 = vector.extract_strided_slice %13 {offsets = [0, 40], sizes = [8, 8], strides = [1, 1]} : vector<8x96xf32> to vector<8x8xf32>
    %37 = vector.extract_strided_slice %13 {offsets = [0, 72], sizes = [8, 8], strides = [1, 1]} : vector<8x96xf32> to vector<8x8xf32>
    %38 = arith.truncf %35 : vector<8x8xf32> to vector<8x8xbf16>
    %39 = arith.truncf %36 : vector<8x8xf32> to vector<8x8xbf16>
    %cst_15 = arith.constant dense<0.000000e+00> : vector<8x8xf32>
    %40 = tpu.matmul %38, %39, %cst_15 {dimension_numbers = #tpu.dot_dimension_numbers<[1], [1], [0], [0], [0, 0, 1, 0], [], []>} : vector<8x8xbf16>, vector<8x8xbf16>, vector<8x8xf32> -> vector<8x8xf32>
    %41 = vector.broadcast %6 : vector<1x8xf32> to vector<8x8xf32>
    %42 = arith.addf %40, %41 : vector<8x8xf32>
    %cst_16 = arith.constant dense<0xFF800000> : vector<8xf32>
    %43 = vector.multi_reduction <maximumf>, %42, %cst_16 [1] : vector<8x8xf32> to vector<8xf32>
    %44 = vector.shape_cast %43 : vector<8xf32> to vector<8x1xf32>
    %45 = vector.broadcast %44 : vector<8x1xf32> to vector<8x8xf32>
    %46 = arith.subf %42, %45 : vector<8x8xf32>
    %47 = math.exp %46 : vector<8x8xf32>
    %cst_17 = arith.constant dense<0.000000e+00> : vector<8xf32>
    %48 = vector.multi_reduction <add>, %47, %cst_17 [1] : vector<8x8xf32> to vector<8xf32>
    %49 = vector.shape_cast %48 : vector<8xf32> to vector<8x1xf32>
    %50 = tpu.reciprocal %49 {approx = true} : vector<8x1xf32> -> vector<8x1xf32>
    %51 = vector.broadcast %50 : vector<8x1xf32> to vector<8x8xf32>
    %52 = arith.mulf %47, %51 : vector<8x8xf32>
    %53 = arith.truncf %52 : vector<8x8xf32> to vector<8x8xbf16>
    %54 = arith.truncf %37 : vector<8x8xf32> to vector<8x8xbf16>
    %cst_18 = arith.constant dense<0.000000e+00> : vector<8x8xf32>
    %55 = tpu.matmul %53, %54, %cst_18 {dimension_numbers = #tpu.dot_dimension_numbers<[1], [0], [0], [1], [0, 0, 1, 1], [], []>} : vector<8x8xbf16>, vector<8x8xbf16>, vector<8x8xf32> -> vector<8x8xf32>
    %56 = vector.extract_strided_slice %13 {offsets = [0, 16], sizes = [8, 8], strides = [1, 1]} : vector<8x96xf32> to vector<8x8xf32>
    %57 = vector.extract_strided_slice %13 {offsets = [0, 48], sizes = [8, 8], strides = [1, 1]} : vector<8x96xf32> to vector<8x8xf32>
    %58 = vector.extract_strided_slice %13 {offsets = [0, 80], sizes = [8, 8], strides = [1, 1]} : vector<8x96xf32> to vector<8x8xf32>
    %59 = arith.truncf %56 : vector<8x8xf32> to vector<8x8xbf16>
    %60 = arith.truncf %57 : vector<8x8xf32> to vector<8x8xbf16>
    %cst_19 = arith.constant dense<0.000000e+00> : vector<8x8xf32>
    %61 = tpu.matmul %59, %60, %cst_19 {dimension_numbers = #tpu.dot_dimension_numbers<[1], [1], [0], [0], [0, 0, 1, 0], [], []>} : vector<8x8xbf16>, vector<8x8xbf16>, vector<8x8xf32> -> vector<8x8xf32>
    %62 = vector.broadcast %6 : vector<1x8xf32> to vector<8x8xf32>
    %63 = arith.addf %61, %62 : vector<8x8xf32>
    %cst_20 = arith.constant dense<0xFF800000> : vector<8xf32>
    %64 = vector.multi_reduction <maximumf>, %63, %cst_20 [1] : vector<8x8xf32> to vector<8xf32>
    %65 = vector.shape_cast %64 : vector<8xf32> to vector<8x1xf32>
    %66 = vector.broadcast %65 : vector<8x1xf32> to vector<8x8xf32>
    %67 = arith.subf %63, %66 : vector<8x8xf32>
    %68 = math.exp %67 : vector<8x8xf32>
    %cst_21 = arith.constant dense<0.000000e+00> : vector<8xf32>
    %69 = vector.multi_reduction <add>, %68, %cst_21 [1] : vector<8x8xf32> to vector<8xf32>
    %70 = vector.shape_cast %69 : vector<8xf32> to vector<8x1xf32>
    %71 = tpu.reciprocal %70 {approx = true} : vector<8x1xf32> -> vector<8x1xf32>
    %72 = vector.broadcast %71 : vector<8x1xf32> to vector<8x8xf32>
    %73 = arith.mulf %68, %72 : vector<8x8xf32>
    %74 = arith.truncf %73 : vector<8x8xf32> to vector<8x8xbf16>
    %75 = arith.truncf %58 : vector<8x8xf32> to vector<8x8xbf16>
    %cst_22 = arith.constant dense<0.000000e+00> : vector<8x8xf32>
    %76 = tpu.matmul %74, %75, %cst_22 {dimension_numbers = #tpu.dot_dimension_numbers<[1], [0], [0], [1], [0, 0, 1, 1], [], []>} : vector<8x8xbf16>, vector<8x8xbf16>, vector<8x8xf32> -> vector<8x8xf32>
    %77 = vector.extract_strided_slice %13 {offsets = [0, 24], sizes = [8, 8], strides = [1, 1]} : vector<8x96xf32> to vector<8x8xf32>
    %78 = vector.extract_strided_slice %13 {offsets = [0, 56], sizes = [8, 8], strides = [1, 1]} : vector<8x96xf32> to vector<8x8xf32>
    %79 = vector.extract_strided_slice %13 {offsets = [0, 88], sizes = [8, 8], strides = [1, 1]} : vector<8x96xf32> to vector<8x8xf32>
    %80 = arith.truncf %77 : vector<8x8xf32> to vector<8x8xbf16>
    %81 = arith.truncf %78 : vector<8x8xf32> to vector<8x8xbf16>
    %cst_23 = arith.constant dense<0.000000e+00> : vector<8x8xf32>
    %82 = tpu.matmul %80, %81, %cst_23 {dimension_numbers = #tpu.dot_dimension_numbers<[1], [1], [0], [0], [0, 0, 1, 0], [], []>} : vector<8x8xbf16>, vector<8x8xbf16>, vector<8x8xf32> -> vector<8x8xf32>
    %83 = vector.broadcast %6 : vector<1x8xf32> to vector<8x8xf32>
    %84 = arith.addf %82, %83 : vector<8x8xf32>
    %cst_24 = arith.constant dense<0xFF800000> : vector<8xf32>
    %85 = vector.multi_reduction <maximumf>, %84, %cst_24 [1] : vector<8x8xf32> to vector<8xf32>
    %86 = vector.shape_cast %85 : vector<8xf32> to vector<8x1xf32>
    %87 = vector.broadcast %86 : vector<8x1xf32> to vector<8x8xf32>
    %88 = arith.subf %84, %87 : vector<8x8xf32>
    %89 = math.exp %88 : vector<8x8xf32>
    %cst_25 = arith.constant dense<0.000000e+00> : vector<8xf32>
    %90 = vector.multi_reduction <add>, %89, %cst_25 [1] : vector<8x8xf32> to vector<8xf32>
    %91 = vector.shape_cast %90 : vector<8xf32> to vector<8x1xf32>
    %92 = tpu.reciprocal %91 {approx = true} : vector<8x1xf32> -> vector<8x1xf32>
    %93 = vector.broadcast %92 : vector<8x1xf32> to vector<8x8xf32>
    %94 = arith.mulf %89, %93 : vector<8x8xf32>
    %95 = arith.truncf %94 : vector<8x8xf32> to vector<8x8xbf16>
    %96 = arith.truncf %79 : vector<8x8xf32> to vector<8x8xbf16>
    %cst_26 = arith.constant dense<0.000000e+00> : vector<8x8xf32>
    %97 = tpu.matmul %95, %96, %cst_26 {dimension_numbers = #tpu.dot_dimension_numbers<[1], [0], [0], [1], [0, 0, 1, 1], [], []>} : vector<8x8xbf16>, vector<8x8xbf16>, vector<8x8xf32> -> vector<8x8xf32>
    %98 = tpu.concatenate %34, %55, %76, %97 in 1 : vector<8x8xf32>, vector<8x8xf32>, vector<8x8xf32>, vector<8x8xf32> -> vector<8x32xf32>
    %99 = arith.truncf %98 : vector<8x32xf32> to vector<8x32xbf16>
    %c0_27 = arith.constant 0 : index
    %c0_28 = arith.constant 0 : index
    %c0_29 = arith.constant 0 : index
    %100 = vector.load %arg9[%c0_27, %c0_28, %c0_29] : memref<1x32x32xbf16, #tpu.memory_space<vmem>>, vector<1x32x32xbf16>
    %101 = vector.shape_cast %100 : vector<1x32x32xbf16> to vector<32x32xbf16>
    %cst_30 = arith.constant dense<0.000000e+00> : vector<8x32xf32>
    %102 = tpu.matmul %99, %101, %cst_30 {dimension_numbers = #tpu.dot_dimension_numbers<[1], [0], [0], [1], [0, 0, 1, 1], [], []>} : vector<8x32xbf16>, vector<32x32xbf16>, vector<8x32xf32> -> vector<8x32xf32>
    %c0_31 = arith.constant 0 : index
    %c0_32 = arith.constant 0 : index
    %c0_33 = arith.constant 0 : index
    %103 = vector.load %arg10[%c0_31, %c0_32, %c0_33] : memref<1x1x32xf32, #tpu.memory_space<vmem>>, vector<1x1x32xf32>
    %104 = vector.shape_cast %103 : vector<1x1x32xf32> to vector<1x32xf32>
    %105 = vector.broadcast %104 : vector<1x32xf32> to vector<8x32xf32>
    %106 = arith.addf %102, %105 : vector<8x32xf32>
    %107 = arith.addf %106, %3 : vector<8x32xf32>
    %c0_34 = arith.constant 0 : index
    %c0_35 = arith.constant 0 : index
    %c0_36 = arith.constant 0 : index
    %108 = vector.load %arg11[%c0_34, %c0_35, %c0_36] : memref<1x1x32xf32, #tpu.memory_space<vmem>>, vector<1x1x32xf32>
    %109 = vector.shape_cast %108 : vector<1x1x32xf32> to vector<1x32xf32>
    %c0_37 = arith.constant 0 : index
    %c0_38 = arith.constant 0 : index
    %c0_39 = arith.constant 0 : index
    %110 = vector.load %arg12[%c0_37, %c0_38, %c0_39] : memref<1x1x32xf32, #tpu.memory_space<vmem>>, vector<1x1x32xf32>
    %111 = vector.shape_cast %110 : vector<1x1x32xf32> to vector<1x32xf32>
    %cst_40 = arith.constant dense<0.000000e+00> : vector<8xf32>
    %112 = vector.multi_reduction <add>, %107, %cst_40 [1] : vector<8x32xf32> to vector<8xf32>
    %113 = vector.shape_cast %112 : vector<8xf32> to vector<8x1xf32>
    %cst_41 = arith.constant 3.200000e+01 : f32
    %114 = vector.broadcast %cst_41 : f32 to vector<8x1xf32>
    %115 = arith.divf %113, %114 : vector<8x1xf32>
    %116 = vector.broadcast %115 : vector<8x1xf32> to vector<8x32xf32>
    %117 = arith.subf %107, %116 : vector<8x32xf32>
    %118 = arith.mulf %117, %117 : vector<8x32xf32>
    %cst_42 = arith.constant dense<0.000000e+00> : vector<8xf32>
    %119 = vector.multi_reduction <add>, %118, %cst_42 [1] : vector<8x32xf32> to vector<8xf32>
    %120 = vector.shape_cast %119 : vector<8xf32> to vector<8x1xf32>
    %cst_43 = arith.constant 3.200000e+01 : f32
    %121 = vector.broadcast %cst_43 : f32 to vector<8x1xf32>
    %122 = arith.divf %120, %121 : vector<8x1xf32>
    %123 = vector.broadcast %115 : vector<8x1xf32> to vector<8x32xf32>
    %124 = arith.subf %107, %123 : vector<8x32xf32>
    %cst_44 = arith.constant 9.99999996E-13 : f32
    %125 = vector.broadcast %cst_44 : f32 to vector<8x1xf32>
    %126 = arith.addf %122, %125 : vector<8x1xf32>
    %127 = math.rsqrt %126 : vector<8x1xf32>
    %128 = vector.broadcast %127 : vector<8x1xf32> to vector<8x32xf32>
    %129 = arith.mulf %124, %128 : vector<8x32xf32>
    %130 = vector.broadcast %109 : vector<1x32xf32> to vector<8x32xf32>
    %131 = arith.mulf %129, %130 : vector<8x32xf32>
    %132 = vector.broadcast %111 : vector<1x32xf32> to vector<8x32xf32>
    %133 = arith.addf %131, %132 : vector<8x32xf32>
    %134 = arith.truncf %133 : vector<8x32xf32> to vector<8x32xbf16>
    %c0_45 = arith.constant 0 : index
    %c0_46 = arith.constant 0 : index
    %c0_47 = arith.constant 0 : index
    %135 = vector.load %arg13[%c0_45, %c0_46, %c0_47] : memref<1x32x64xbf16, #tpu.memory_space<vmem>>, vector<1x32x64xbf16>
    %136 = vector.shape_cast %135 : vector<1x32x64xbf16> to vector<32x64xbf16>
    %cst_48 = arith.constant dense<0.000000e+00> : vector<8x64xf32>
    %137 = tpu.matmul %134, %136, %cst_48 {dimension_numbers = #tpu.dot_dimension_numbers<[1], [0], [0], [1], [0, 0, 1, 1], [], []>} : vector<8x32xbf16>, vector<32x64xbf16>, vector<8x64xf32> -> vector<8x64xf32>
    %c0_49 = arith.constant 0 : index
    %c0_50 = arith.constant 0 : index
    %c0_51 = arith.constant 0 : index
    %138 = vector.load %arg14[%c0_49, %c0_50, %c0_51] : memref<1x1x64xf32, #tpu.memory_space<vmem>>, vector<1x1x64xf32>
    %139 = vector.shape_cast %138 : vector<1x1x64xf32> to vector<1x64xf32>
    %140 = vector.broadcast %139 : vector<1x64xf32> to vector<8x64xf32>
    %141 = arith.addf %137, %140 : vector<8x64xf32>
    %142 = arith.mulf %141, %141 : vector<8x64xf32>
    %143 = arith.mulf %141, %142 : vector<8x64xf32>
    %cst_52 = arith.constant 4.471500e-02 : f32
    %144 = vector.broadcast %cst_52 : f32 to vector<8x64xf32>
    %145 = arith.mulf %144, %143 : vector<8x64xf32>
    %146 = arith.addf %141, %145 : vector<8x64xf32>
    %cst_53 = arith.constant 0.797884583 : f32
    %147 = vector.broadcast %cst_53 : f32 to vector<8x64xf32>
    %148 = arith.mulf %147, %146 : vector<8x64xf32>
    %149 = math.tanh %148 : vector<8x64xf32>
    %cst_54 = arith.constant 1.000000e+00 : f32
    %150 = vector.broadcast %cst_54 : f32 to vector<8x64xf32>
    %151 = arith.addf %150, %149 : vector<8x64xf32>
    %cst_55 = arith.constant 5.000000e-01 : f32
    %152 = vector.broadcast %cst_55 : f32 to vector<8x64xf32>
    %153 = arith.mulf %152, %151 : vector<8x64xf32>
    %154 = arith.mulf %141, %153 : vector<8x64xf32>
    %155 = arith.truncf %154 : vector<8x64xf32> to vector<8x64xbf16>
    %c0_56 = arith.constant 0 : index
    %c0_57 = arith.constant 0 : index
    %c0_58 = arith.constant 0 : index
    %156 = vector.load %arg15[%c0_56, %c0_57, %c0_58] : memref<1x64x32xbf16, #tpu.memory_space<vmem>>, vector<1x64x32xbf16>
    %157 = vector.shape_cast %156 : vector<1x64x32xbf16> to vector<64x32xbf16>
    %cst_59 = arith.constant dense<0.000000e+00> : vector<8x32xf32>
    %158 = tpu.matmul %155, %157, %cst_59 {dimension_numbers = #tpu.dot_dimension_numbers<[1], [0], [0], [1], [0, 0, 1, 1], [], []>} : vector<8x64xbf16>, vector<64x32xbf16>, vector<8x32xf32> -> vector<8x32xf32>
    %c0_60 = arith.constant 0 : index
    %c0_61 = arith.constant 0 : index
    %c0_62 = arith.constant 0 : index
    %159 = vector.load %arg16[%c0_60, %c0_61, %c0_62] : memref<1x1x32xf32, #tpu.memory_space<vmem>>, vector<1x1x32xf32>
    %160 = vector.shape_cast %159 : vector<1x1x32xf32> to vector<1x32xf32>
    %161 = vector.broadcast %160 : vector<1x32xf32> to vector<8x32xf32>
    %162 = arith.addf %158, %161 : vector<8x32xf32>
    %163 = arith.addf %162, %133 : vector<8x32xf32>
    %c0_63 = arith.constant 0 : index
    %c0_64 = arith.constant 0 : index
    %c0_65 = arith.constant 0 : index
    %164 = vector.load %arg17[%c0_63, %c0_64, %c0_65] : memref<1x1x32xf32, #tpu.memory_space<vmem>>, vector<1x1x32xf32>
    %165 = vector.shape_cast %164 : vector<1x1x32xf32> to vector<1x32xf32>
    %c0_66 = arith.constant 0 : index
    %c0_67 = arith.constant 0 : index
    %c0_68 = arith.constant 0 : index
    %166 = vector.load %arg18[%c0_66, %c0_67, %c0_68] : memref<1x1x32xf32, #tpu.memory_space<vmem>>, vector<1x1x32xf32>
    %167 = vector.shape_cast %166 : vector<1x1x32xf32> to vector<1x32xf32>
    %cst_69 = arith.constant dense<0.000000e+00> : vector<8xf32>
    %168 = vector.multi_reduction <add>, %163, %cst_69 [1] : vector<8x32xf32> to vector<8xf32>
    %169 = vector.shape_cast %168 : vector<8xf32> to vector<8x1xf32>
    %cst_70 = arith.constant 3.200000e+01 : f32
    %170 = vector.broadcast %cst_70 : f32 to vector<8x1xf32>
    %171 = arith.divf %169, %170 : vector<8x1xf32>
    %172 = vector.broadcast %171 : vector<8x1xf32> to vector<8x32xf32>
    %173 = arith.subf %163, %172 : vector<8x32xf32>
    %174 = arith.mulf %173, %173 : vector<8x32xf32>
    %cst_71 = arith.constant dense<0.000000e+00> : vector<8xf32>
    %175 = vector.multi_reduction <add>, %174, %cst_71 [1] : vector<8x32xf32> to vector<8xf32>
    %176 = vector.shape_cast %175 : vector<8xf32> to vector<8x1xf32>
    %cst_72 = arith.constant 3.200000e+01 : f32
    %177 = vector.broadcast %cst_72 : f32 to vector<8x1xf32>
    %178 = arith.divf %176, %177 : vector<8x1xf32>
    %179 = vector.broadcast %171 : vector<8x1xf32> to vector<8x32xf32>
    %180 = arith.subf %163, %179 : vector<8x32xf32>
    %cst_73 = arith.constant 9.99999996E-13 : f32
    %181 = vector.broadcast %cst_73 : f32 to vector<8x1xf32>
    %182 = arith.addf %178, %181 : vector<8x1xf32>
    %183 = math.rsqrt %182 : vector<8x1xf32>
    %184 = vector.broadcast %183 : vector<8x1xf32> to vector<8x32xf32>
    %185 = arith.mulf %180, %184 : vector<8x32xf32>
    %186 = vector.broadcast %165 : vector<1x32xf32> to vector<8x32xf32>
    %187 = arith.mulf %185, %186 : vector<8x32xf32>
    %188 = vector.broadcast %167 : vector<1x32xf32> to vector<8x32xf32>
    %189 = arith.addf %187, %188 : vector<8x32xf32>
    %c0_74 = arith.constant 0 : index
    %c0_75 = arith.constant 0 : index
    %190 = vector.load %arg24[%c0_74, %c0_75] : memref<8x32xf32, #tpu.memory_space<vmem>>, vector<8x32xf32>
    tpu.vector_store %arg24[%c0_74, %c0_75], %189 {strides = array<i32>} : memref<8x32xf32, #tpu.memory_space<vmem>>, vector<8x32xf32>,
    %c1_i32 = arith.constant 1 : i32
    %191 = arith.cmpi eq, %arg1, %c1_i32 : i32
    %192 = arith.extui %191 : i1 to i32
    %c0_i32_76 = arith.constant 0 : i32
    %193 = arith.cmpi ne, %192, %c0_i32_76 : i32
    scf.if %193 {
      %c0_77 = arith.constant 0 : index
      %c0_78 = arith.constant 0 : index
      %c0_79 = arith.constant 0 : index
      %194 = vector.load %arg4[%c0_77, %c0_78, %c0_79] : memref<1x8x1xf32, #tpu.memory_space<vmem>>, vector<1x8x1xf32>
      %195 = vector.shape_cast %194 : vector<1x8x1xf32> to vector<8x1xf32>
      %196 = vector.broadcast %195 : vector<8x1xf32> to vector<8x32xf32>
      %197 = arith.mulf %189, %196 : vector<8x32xf32>
      %cst_80 = arith.constant dense<0.000000e+00> : vector<32xf32>
      %198 = vector.multi_reduction <add>, %197, %cst_80 [0] : vector<8x32xf32> to vector<32xf32>
      %199 = vector.shape_cast %198 : vector<32xf32> to vector<1x32xf32>
      %cst_81 = arith.constant dense<0.000000e+00> : vector<1xf32>
      %200 = vector.multi_reduction <add>, %195, %cst_81 [0] : vector<8x1xf32> to vector<1xf32>
      %201 = vector.shape_cast %200 : vector<1xf32> to vector<1x1xf32>
      %cst_82 = arith.constant 9.99999971E-10 : f32
      %202 = vector.broadcast %cst_82 : f32 to vector<1x1xf32>
      %203 = arith.maximumf %201, %202 : vector<1x1xf32>
      %204 = vector.broadcast %203 : vector<1x1xf32> to vector<1x32xf32>
      %205 = arith.divf %199, %204 : vector<1x32xf32>
      %206 = arith.truncf %205 : vector<1x32xf32> to vector<1x32xbf16>
      %c0_83 = arith.constant 0 : index
      %c0_84 = arith.constant 0 : index
      %207 = vector.load %arg19[%c0_83, %c0_84] : memref<32x16xbf16, #tpu.memory_space<vmem>>, vector<32x16xbf16>
      %cst_85 = arith.constant dense<0.000000e+00> : vector<1x16xf32>
      %208 = tpu.matmul %206, %207, %cst_85 {dimension_numbers = #tpu.dot_dimension_numbers<[1], [0], [0], [1], [0, 0, 1, 1], [], []>} : vector<1x32xbf16>, vector<32x16xbf16>, vector<1x16xf32> -> vector<1x16xf32>
      %c0_86 = arith.constant 0 : index
      %c0_87 = arith.constant 0 : index
      %209 = vector.load %arg20[%c0_86, %c0_87] : memref<1x16xf32, #tpu.memory_space<vmem>>, vector<1x16xf32>
      %210 = arith.addf %208, %209 : vector<1x16xf32>
      %cst_88 = arith.constant 0.000000e+00 : f32
      %211 = vector.broadcast %cst_88 : f32 to vector<1x16xf32>
      %212 = arith.maximumf %210, %211 : vector<1x16xf32>
      %213 = arith.truncf %212 : vector<1x16xf32> to vector<1x16xbf16>
      %c0_89 = arith.constant 0 : index
      %c0_90 = arith.constant 0 : index
      %214 = vector.load %arg21[%c0_89, %c0_90] : memref<16x16xbf16, #tpu.memory_space<vmem>>, vector<16x16xbf16>
      %cst_91 = arith.constant dense<0.000000e+00> : vector<1x16xf32>
      %215 = tpu.matmul %213, %214, %cst_91 {dimension_numbers = #tpu.dot_dimension_numbers<[1], [0], [0], [1], [0, 0, 1, 1], [], []>} : vector<1x16xbf16>, vector<16x16xbf16>, vector<1x16xf32> -> vector<1x16xf32>
      %c0_92 = arith.constant 0 : index
      %c0_93 = arith.constant 0 : index
      %216 = vector.load %arg22[%c0_92, %c0_93] : memref<1x16xf32, #tpu.memory_space<vmem>>, vector<1x16xf32>
      %217 = arith.addf %215, %216 : vector<1x16xf32>
      %c0_94 = arith.constant 0 : index
      %c0_95 = arith.constant 0 : index
      %c0_96 = arith.constant 0 : index
      %218 = vector.load %arg23[%c0_94, %c0_95, %c0_96] : memref<1x1x16xf32, #tpu.memory_space<vmem>>, vector<1x1x16xf32>
      %219 = vector.shape_cast %218 : vector<1x1x16xf32> to vector<1x16xf32>
      %220 = vector.shape_cast %217 : vector<1x16xf32> to vector<1x1x16xf32>
      tpu.vector_store %arg23[%c0_94, %c0_95, %c0_96], %220 {strides = array<i32>} : memref<1x1x16xf32, #tpu.memory_space<vmem>>, vector<1x1x16xf32>,
    } else {
    }
    return
  }
  func.func @transform_0(%arg0: i32, %arg1: i32) -> (i32, i32, i32) {
    %c0_i32 = arith.constant 0 : i32
    %c0_i32_0 = arith.constant 0 : i32
    %c0_i32_1 = arith.constant 0 : i32
    return %arg0, %c0_i32, %c0_i32_0 : i32, i32, i32
  }
  func.func @transform_1(%arg0: i32, %arg1: i32) -> (i32, i32, i32) {
    %c0_i32 = arith.constant 0 : i32
    %c0_i32_0 = arith.constant 0 : i32
    %c0_i32_1 = arith.constant 0 : i32
    return %arg0, %c0_i32, %c0_i32_0 : i32, i32, i32
  }
  func.func @transform_2(%arg0: i32, %arg1: i32) -> (i32, i32, i32) {
    %c0_i32 = arith.constant 0 : i32
    %c0_i32_0 = arith.constant 0 : i32
    %c0_i32_1 = arith.constant 0 : i32
    return %arg0, %c0_i32, %c0_i32_0 : i32, i32, i32
  }
  func.func @transform_3(%arg0: i32, %arg1: i32) -> (i32, i32) {
    %c0_i32 = arith.constant 0 : i32
    %c0_i32_0 = arith.constant 0 : i32
    %c0_i32_1 = arith.constant 0 : i32
    return %c0_i32, %c0_i32_0 : i32, i32
  }
  func.func @transform_4(%arg0: i32, %arg1: i32) -> (i32, i32) {
    %c0_i32 = arith.constant 0 : i32
    %c0_i32_0 = arith.constant 0 : i32
    %c0_i32_1 = arith.constant 0 : i32
    return %c0_i32, %c0_i32_0 : i32, i32
  }
  func.func @transform_5(%arg0: i32, %arg1: i32) -> (i32, i32, i32) {
    %c0_i32 = arith.constant 0 : i32
    %c0_i32_0 = arith.constant 0 : i32
    %c0_i32_1 = arith.constant 0 : i32
    return %arg1, %c0_i32, %c0_i32_0 : i32, i32, i32
  }
  func.func @transform_6(%arg0: i32, %arg1: i32) -> (i32, i32, i32) {
    %c0_i32 = arith.constant 0 : i32
    %c0_i32_0 = arith.constant 0 : i32
    %c0_i32_1 = arith.constant 0 : i32
    return %arg1, %c0_i32, %c0_i32_0 : i32, i32, i32
  }
  func.func @transform_7(%arg0: i32, %arg1: i32) -> (i32, i32, i32) {
    %c0_i32 = arith.constant 0 : i32
    %c0_i32_0 = arith.constant 0 : i32
    %c0_i32_1 = arith.constant 0 : i32
    return %arg1, %c0_i32, %c0_i32_0 : i32, i32, i32
  }
  func.func @transform_8(%arg0: i32, %arg1: i32) -> (i32, i32, i32) {
    %c0_i32 = arith.constant 0 : i32
    %c0_i32_0 = arith.constant 0 : i32
    %c0_i32_1 = arith.constant 0 : i32
    return %arg1, %c0_i32, %c0_i32_0 : i32, i32, i32
  }
  func.func @transform_9(%arg0: i32, %arg1: i32) -> (i32, i32, i32) {
    %c0_i32 = arith.constant 0 : i32
    %c0_i32_0 = arith.constant 0 : i32
    %c0_i32_1 = arith.constant 0 : i32
    return %arg1, %c0_i32, %c0_i32_0 : i32, i32, i32
  }
  func.func @transform_10(%arg0: i32, %arg1: i32) -> (i32, i32, i32) {
    %c0_i32 = arith.constant 0 : i32
    %c0_i32_0 = arith.constant 0 : i32
    %c0_i32_1 = arith.constant 0 : i32
    return %arg1, %c0_i32, %c0_i32_0 : i32, i32, i32
  }
  func.func @transform_11(%arg0: i32, %arg1: i32) -> (i32, i32, i32) {
    %c0_i32 = arith.constant 0 : i32
    %c0_i32_0 = arith.constant 0 : i32
    %c0_i32_1 = arith.constant 0 : i32
    return %arg1, %c0_i32, %c0_i32_0 : i32, i32, i32
  }
  func.func @transform_12(%arg0: i32, %arg1: i32) -> (i32, i32, i32) {
    %c0_i32 = arith.constant 0 : i32
    %c0_i32_0 = arith.constant 0 : i32
    %c0_i32_1 = arith.constant 0 : i32
    return %arg1, %c0_i32, %c0_i32_0 : i32, i32, i32
  }
  func.func @transform_13(%arg0: i32, %arg1: i32) -> (i32, i32, i32) {
    %c0_i32 = arith.constant 0 : i32
    %c0_i32_0 = arith.constant 0 : i32
    %c0_i32_1 = arith.constant 0 : i32
    return %arg1, %c0_i32, %c0_i32_0 : i32, i32, i32
  }
  func.func @transform_14(%arg0: i32, %arg1: i32) -> (i32, i32, i32) {
    %c0_i32 = arith.constant 0 : i32
    %c0_i32_0 = arith.constant 0 : i32
    %c0_i32_1 = arith.constant 0 : i32
    return %arg1, %c0_i32, %c0_i32_0 : i32, i32, i32
  }
  func.func @transform_15(%arg0: i32, %arg1: i32) -> (i32, i32, i32) {
    %c0_i32 = arith.constant 0 : i32
    %c0_i32_0 = arith.constant 0 : i32
    %c0_i32_1 = arith.constant 0 : i32
    return %arg1, %c0_i32, %c0_i32_0 : i32, i32, i32
  }
  func.func @transform_16(%arg0: i32, %arg1: i32) -> (i32, i32, i32) {
    %c0_i32 = arith.constant 0 : i32
    %c0_i32_0 = arith.constant 0 : i32
    %c0_i32_1 = arith.constant 0 : i32
    return %arg1, %c0_i32, %c0_i32_0 : i32, i32, i32
  }
  func.func @transform_17(%arg0: i32, %arg1: i32) -> (i32, i32) {
    %c0_i32 = arith.constant 0 : i32
    %c0_i32_0 = arith.constant 0 : i32
    %c0_i32_1 = arith.constant 0 : i32
    return %c0_i32, %c0_i32_0 : i32, i32
  }
  func.func @transform_18(%arg0: i32, %arg1: i32) -> (i32, i32) {
    %c0_i32 = arith.constant 0 : i32
    %c0_i32_0 = arith.constant 0 : i32
    %c0_i32_1 = arith.constant 0 : i32
    return %c0_i32, %c0_i32_0 : i32, i32
  }
  func.func @transform_19(%arg0: i32, %arg1: i32) -> (i32, i32) {
    %c0_i32 = arith.constant 0 : i32
    %c0_i32_0 = arith.constant 0 : i32
    %c0_i32_1 = arith.constant 0 : i32
    return %c0_i32, %c0_i32_0 : i32, i32
  }
  func.func @transform_20(%arg0: i32, %arg1: i32) -> (i32, i32) {
    %c0_i32 = arith.constant 0 : i32
    %c0_i32_0 = arith.constant 0 : i32
    %c0_i32_1 = arith.constant 0 : i32
    return %c0_i32, %c0_i32_0 : i32, i32
  }
  func.func @transform_21(%arg0: i32, %arg1: i32) -> (i32, i32, i32) {
    %c0_i32 = arith.constant 0 : i32
    %c0_i32_0 = arith.constant 0 : i32
    %c0_i32_1 = arith.constant 0 : i32
    return %arg0, %c0_i32, %c0_i32_0 : i32, i32, i32
  }
}

</mosaic_0001>

<llo_original>
// kernel: sbert_forward.1
$region0: #{sbert_forward.1}
  #allocation0 [shape = 'u32[]', space=smem, size = 0x4, offset = 0x4, fixed_abs, tag = 'smem constant byte address 0x4 - core index']
  #allocation1 [shape = 'u32[144,128]{1,0:T(1,128)}', space=vmem, size = 0x12000, scoped, tag = 'internal scratch']
  #allocation2 [shape = 'f32[8,32]{1,0:T(8,128)}', space=vmem, size = 0x1000, scoped, tag = 'scratch operand']
  %s0 = inlined_call_operand.vmem [shape: f32[2,8,32], index: 0, kind: input, shape index: {}]
  %s1 = inlined_call_operand.vmem [shape: f32[2,1,8], index: 1, kind: input, shape index: {}]
  %s2 = inlined_call_operand.vmem [shape: f32[2,8,1], index: 2, kind: input, shape index: {}]
  %s3 = inlined_call_operand.vmem [shape: f32[1,32], index: 3, kind: input, shape index: {}]
  %s4 = inlined_call_operand.vmem [shape: f32[1,32], index: 4, kind: input, shape index: {}]
  %s5 = inlined_call_operand.vmem [shape: bf16[2,32,96], index: 5, kind: input, shape index: {}]
  %s6 = inlined_call_operand.vmem [shape: f32[2,1,96], index: 6, kind: input, shape index: {}]
  %s7 = inlined_call_operand.vmem [shape: bf16[2,32,32], index: 7, kind: input, shape index: {}]
  %s8 = inlined_call_operand.vmem [shape: f32[2,1,32], index: 8, kind: input, shape index: {}]
  %s9 = inlined_call_operand.vmem [shape: f32[2,1,32], index: 9, kind: input, shape index: {}]
  %s10 = inlined_call_operand.vmem [shape: f32[2,1,32], index: 10, kind: input, shape index: {}]
  %s11 = inlined_call_operand.vmem [shape: bf16[2,32,64], index: 11, kind: input, shape index: {}]
  %s12 = inlined_call_operand.vmem [shape: f32[2,1,64], index: 12, kind: input, shape index: {}]
  %s13 = inlined_call_operand.vmem [shape: bf16[2,64,32], index: 13, kind: input, shape index: {}]
  %s14 = inlined_call_operand.vmem [shape: f32[2,1,32], index: 14, kind: input, shape index: {}]
  %s15 = inlined_call_operand.vmem [shape: f32[2,1,32], index: 15, kind: input, shape index: {}]
  %s16 = inlined_call_operand.vmem [shape: f32[2,1,32], index: 16, kind: input, shape index: {}]
  %s17 = inlined_call_operand.vmem [shape: bf16[32,16], index: 17, kind: input, shape index: {}]
  %s18 = inlined_call_operand.vmem [shape: f32[1,16], index: 18, kind: input, shape index: {}]
  %s19 = inlined_call_operand.vmem [shape: bf16[16,16], index: 19, kind: input, shape index: {}]
  %s20 = inlined_call_operand.vmem [shape: f32[1,16], index: 20, kind: input, shape index: {}]
  %s21 = inlined_call_operand.hbm [shape: f32[2,1,16], index: 21, kind: output, shape index: {}]
  %s22 = sld [smem:[#allocation0]]
  $region125: #{sbert_forward.1} parent=0
    _
  %s24 = ssub.s32 1, %s22
  %s25 = scalar_select 0, %s24, %s22
  $region1: #{sbert_forward.1} parent=0
    #allocation3 [shape = 'u8[1024]{0}', space=vmem, size = 0x400, scoped, tag = 'output window, operand 0']
    #allocation4 [shape = 's32[2]{0}', space=sflag, size = 0x8, scoped, tag = 'scoped memory for sbert_forward.1']
    %26 = vsyncpa [#allocation4], 0
    %s27 = scalar_lea.sflag [#allocation4], 1
    %28 = vsyncpa %s27, 0
    loop: start=0, step=1, limit=6
    $region2: #{sbert_forward.1} parent=1 // loop_pre_header
      _
    $region3: #{sbert_forward.1} parent=1 // loop_header
      %s30 = sphi 0, %s34
      %p31 = scmp.ge.s32.totalorder %s30, 6
      %s37 = sphi 0, %s49
      %s38 = sphi 0, %s45
      %s39 = sphi 0, %s37
      %s40 = sphi 0, %s38
      %s41 = sphi 0, %s39
      %s42 = sphi 0, %s40
      %s52 = sphi 0, %s54
      %s55 = sphi 0, %s52
      %s56 = sphi 0, %s55
      %s72 = sphi 0, %s56
      %s78 = sphi 0, %s80
      %s81 = sphi 0, %s78
      %s82 = sphi 0, %s81
      %s98 = sphi 0, %s82
      %s104 = sphi 0, %s106
      %s107 = sphi 0, %s104
      %s108 = sphi 0, %s107
      %s124 = sphi 0, %s108
      %s128 = sphi 0, %s128
      %s130 = sphi 0, %s128
      %s131 = sphi 0, %s130
      %s145 = sphi 0, %s131
      %s149 = sphi 0, %s149
      %s151 = sphi 0, %s149
      %s152 = sphi 0, %s151
      %s166 = sphi 0, %s152
      %s172 = sphi 0, %s174
      %s175 = sphi 0, %s172
      %s176 = sphi 0, %s175
      %s192 = sphi 0, %s176
      %s198 = sphi 0, %s200
      %s201 = sphi 0, %s198
      %s202 = sphi 0, %s201
      %s218 = sphi 0, %s202
      %s224 = sphi 0, %s226
      %s227 = sphi 0, %s224
      %s228 = sphi 0, %s227
      %s244 = sphi 0, %s228
      %s250 = sphi 0, %s252
      %s253 = sphi 0, %s250
      %s254 = sphi 0, %s253
      %s270 = sphi 0, %s254
      %s276 = sphi 0, %s278
      %s279 = sphi 0, %s276
      %s280 = sphi 0, %s279
      %s296 = sphi 0, %s280
      %s302 = sphi 0, %s304
      %s305 = sphi 0, %s302
      %s306 = sphi 0, %s305
      %s322 = sphi 0, %s306
      %s328 = sphi 0, %s330
      %s331 = sphi 0, %s328
      %s332 = sphi 0, %s331
      %s348 = sphi 0, %s332
      %s354 = sphi 0, %s356
      %s357 = sphi 0, %s354
      %s358 = sphi 0, %s357
      %s374 = sphi 0, %s358
      %s380 = sphi 0, %s382
      %s383 = sphi 0, %s380
      %s384 = sphi 0, %s383
      %s400 = sphi 0, %s384
      %s406 = sphi 0, %s408
      %s409 = sphi 0, %s406
      %s410 = sphi 0, %s409
      %s426 = sphi 0, %s410
      %s432 = sphi 0, %s434
      %s435 = sphi 0, %s432
      %s436 = sphi 0, %s435
      %s452 = sphi 0, %s436
      %s458 = sphi 0, %s460
      %s461 = sphi 0, %s458
      %s462 = sphi 0, %s461
      %s478 = sphi 0, %s462
      %s482 = sphi 0, %s482
      %s484 = sphi 0, %s482
      %s485 = sphi 0, %s484
      %s499 = sphi 0, %s485
      %s503 = sphi 0, %s503
      %s505 = sphi 0, %s503
      %s506 = sphi 0, %s505
      %s520 = sphi 0, %s506
      %s524 = sphi 0, %s524
      %s526 = sphi 0, %s524
      %s527 = sphi 0, %s526
      %s541 = sphi 0, %s527
      %s545 = sphi 0, %s545
      %s547 = sphi 0, %s545
      %s548 = sphi 0, %s547
      %s562 = sphi 0, %s548
      %s568 = sphi 0, %s570
      %s571 = sphi 0, %s568
      %s572 = sphi 0, %s571
      %s588 = sphi 0, %s572
    $region4: #{sbert_forward.1} parent=1 // loop_header_branch
      %33 = sbr.rel (%p31) target = $region8
    $region5: #{sbert_forward.1} parent=1 // loop_body
      %s35 = ssub.s32 %s30, 1
      %s36 = ssub.s32 %s30, 2
      %s43 = sadd.s32 1, %s38
      %p44 = scmp.ge.s32.totalorder %s43, 2
      %s45 = scalar_select %p44, 0, %s43
      %s46 = sadd.s32 1, %s37
      %s47 = scalar_select %p44, %s46, %s37
      %p48 = scmp.ge.s32.totalorder %s47, 2
      %s49 = scalar_select %p48, 0, %s47
      %s50 = ssub.s32 %s37, %s49
      %p51 = scmp.eq.s32.totalorder %s50, 0
      %s53 = sadd.s32 %s52, 1
      %s54 = scalar_select %p51, %s52, %s53
      %p57 = pneg %p51
      %p58 = scmp.eq.s32.totalorder %s30, 3
      %p59 = por %p57, %p58
      %p60 = scmp.ne.s32.totalorder %s52, %s55
      %p61 = scmp.eq.s32.totalorder %s30, 0
      %p62 = por %p60, %p61
      %p63 = scmp.ne.s32.totalorder %s52, %s55
      %p64 = scmp.eq.s32.totalorder %s35, 3
      %p65 = por %p63, %p64
      %p66 = scmp.ne.s32.totalorder %s55, %s56
      %p67 = scmp.eq.s32.totalorder %s35, 0
      %p68 = por %p66, %p67
      %p69 = scmp.ne.s32.totalorder %s55, %s56
      %p70 = scmp.eq.s32.totalorder %s36, 3
      %p71 = por %p69, %p70
      %p73 = scmp.ne.s32.totalorder %s56, %s72
      %p74 = scmp.eq.s32.totalorder %s36, 0
      %p75 = por %p73, %p74
      %s76 = ssub.s32 %s37, %s49
      %p77 = scmp.eq.s32.totalorder %s76, 0
      %s79 = sadd.s32 %s78, 1
      %s80 = scalar_select %p77, %s78, %s79
      %p83 = pneg %p77
      %p84 = scmp.eq.s32.totalorder %s30, 3
      %p85 = por %p83, %p84
      %p86 = scmp.ne.s32.totalorder %s78, %s81
      %p87 = scmp.eq.s32.totalorder %s30, 0
      %p88 = por %p86, %p87
      %p89 = scmp.ne.s32.totalorder %s78, %s81
      %p90 = scmp.eq.s32.totalorder %s35, 3
      %p91 = por %p89, %p90
      %p92 = scmp.ne.s32.totalorder %s81, %s82
      %p93 = scmp.eq.s32.totalorder %s35, 0
      %p94 = por %p92, %p93
      %p95 = scmp.ne.s32.totalorder %s81, %s82
      %p96 = scmp.eq.s32.totalorder %s36, 3
      %p97 = por %p95, %p96
      %p99 = scmp.ne.s32.totalorder %s82, %s98
      %p100 = scmp.eq.s32.totalorder %s36, 0
      %p101 = por %p99, %p100
      %s102 = ssub.s32 %s37, %s49
      %p103 = scmp.eq.s32.totalorder %s102, 0
      %s105 = sadd.s32 %s104, 1
      %s106 = scalar_select %p103, %s104, %s105
      %p109 = pneg %p103
      %p110 = scmp.eq.s32.totalorder %s30, 3
      %p111 = por %p109, %p110
      %p112 = scmp.ne.s32.totalorder %s104, %s107
      %p113 = scmp.eq.s32.totalorder %s30, 0
      %p114 = por %p112, %p113
      %p115 = scmp.ne.s32.totalorder %s104, %s107
      %p116 = scmp.eq.s32.totalorder %s35, 3
      %p117 = por %p115, %p116
      %p118 = scmp.ne.s32.totalorder %s107, %s108
      %p119 = scmp.eq.s32.totalorder %s35, 0
      %p120 = por %p118, %p119
      %p121 = scmp.ne.s32.totalorder %s107, %s108
      %p122 = scmp.eq.s32.totalorder %s36, 3
      %p123 = por %p121, %p122
      %p125 = scmp.ne.s32.totalorder %s108, %s124
      %p126 = scmp.eq.s32.totalorder %s36, 0
      %p127 = por %p125, %p126
      %s129 = sadd.s32 %s128, 1
      %p132 = scmp.eq.s32.totalorder %s30, 3
      %p133 = scmp.ne.s32.totalorder %s128, %s130
      %p134 = scmp.eq.s32.totalorder %s30, 0
      %p135 = por %p133, %p134
      %p136 = scmp.ne.s32.totalorder %s128, %s130
      %p137 = scmp.eq.s32.totalorder %s35, 3
      %p138 = por %p136, %p137
      %p139 = scmp.ne.s32.totalorder %s130, %s131
      %p140 = scmp.eq.s32.totalorder %s35, 0
      %p141 = por %p139, %p140
      %p142 = scmp.ne.s32.totalorder %s130, %s131
      %p143 = scmp.eq.s32.totalorder %s36, 3
      %p144 = por %p142, %p143
      %p146 = scmp.ne.s32.totalorder %s131, %s145
      %p147 = scmp.eq.s32.totalorder %s36, 0
      %p148 = por %p146, %p147
      %s150 = sadd.s32 %s149, 1
      %p153 = scmp.eq.s32.totalorder %s30, 3
      %p154 = scmp.ne.s32.totalorder %s149, %s151
      %p155 = scmp.eq.s32.totalorder %s30, 0
      %p156 = por %p154, %p155
      %p157 = scmp.ne.s32.totalorder %s149, %s151
      %p158 = scmp.eq.s32.totalorder %s35, 3
      %p159 = por %p157, %p158
      %p160 = scmp.ne.s32.totalorder %s151, %s152
      %p161 = scmp.eq.s32.totalorder %s35, 0
      %p162 = por %p160, %p161
      %p163 = scmp.ne.s32.totalorder %s151, %s152
      %p164 = scmp.eq.s32.totalorder %s36, 3
      %p165 = por %p163, %p164
      %p167 = scmp.ne.s32.totalorder %s152, %s166
      %p168 = scmp.eq.s32.totalorder %s36, 0
      %p169 = por %p167, %p168
      %s170 = ssub.s32 %s38, %s45
      %p171 = scmp.eq.s32.totalorder %s170, 0
      %s173 = sadd.s32 %s172, 1
      %s174 = scalar_select %p171, %s172, %s173
      %p177 = pneg %p171
      %p178 = scmp.eq.s32.totalorder %s30, 3
      %p179 = por %p177, %p178
      %p180 = scmp.ne.s32.totalorder %s172, %s175
      %p181 = scmp.eq.s32.totalorder %s30, 0
      %p182 = por %p180, %p181
      %p183 = scmp.ne.s32.totalorder %s172, %s175
      %p184 = scmp.eq.s32.totalorder %s35, 3
      %p185 = por %p183, %p184
      %p186 = scmp.ne.s32.totalorder %s175, %s176
      %p187 = scmp.eq.s32.totalorder %s35, 0
      %p188 = por %p186, %p187
      %p189 = scmp.ne.s32.totalorder %s175, %s176
      %p190 = scmp.eq.s32.totalorder %s36, 3
      %p191 = por %p189, %p190
      %p193 = scmp.ne.s32.totalorder %s176, %s192
      %p194 = scmp.eq.s32.totalorder %s36, 0
      %p195 = por %p193, %p194
      %s196 = ssub.s32 %s38, %s45
      %p197 = scmp.eq.s32.totalorder %s196, 0
      %s199 = sadd.s32 %s198, 1
      %s200 = scalar_select %p197, %s198, %s199
      %p203 = pneg %p197
      %p204 = scmp.eq.s32.totalorder %s30, 3
      %p205 = por %p203, %p204
      %p206 = scmp.ne.s32.totalorder %s198, %s201
      %p207 = scmp.eq.s32.totalorder %s30, 0
      %p208 = por %p206, %p207
      %p209 = scmp.ne.s32.totalorder %s198, %s201
      %p210 = scmp.eq.s32.totalorder %s35, 3
      %p211 = por %p209, %p210
      %p212 = scmp.ne.s32.totalorder %s201, %s202
      %p213 = scmp.eq.s32.totalorder %s35, 0
      %p214 = por %p212, %p213
      %p215 = scmp.ne.s32.totalorder %s201, %s202
      %p216 = scmp.eq.s32.totalorder %s36, 3
      %p217 = por %p215, %p216
      %p219 = scmp.ne.s32.totalorder %s202, %s218
      %p220 = scmp.eq.s32.totalorder %s36, 0
      %p221 = por %p219, %p220
      %s222 = ssub.s32 %s38, %s45
      %p223 = scmp.eq.s32.totalorder %s222, 0
      %s225 = sadd.s32 %s224, 1
      %s226 = scalar_select %p223, %s224, %s225
      %p229 = pneg %p223
      %p230 = scmp.eq.s32.totalorder %s30, 3
      %p231 = por %p229, %p230
      %p232 = scmp.ne.s32.totalorder %s224, %s227
      %p233 = scmp.eq.s32.totalorder %s30, 0
      %p234 = por %p232, %p233
      %p235 = scmp.ne.s32.totalorder %s224, %s227
      %p236 = scmp.eq.s32.totalorder %s35, 3
      %p237 = por %p235, %p236
      %p238 = scmp.ne.s32.totalorder %s227, %s228
      %p239 = scmp.eq.s32.totalorder %s35, 0
      %p240 = por %p238, %p239
      %p241 = scmp.ne.s32.totalorder %s227, %s228
      %p242 = scmp.eq.s32.totalorder %s36, 3
      %p243 = por %p241, %p242
      %p245 = scmp.ne.s32.totalorder %s228, %s244
      %p246 = scmp.eq.s32.totalorder %s36, 0
      %p247 = por %p245, %p246
      %s248 = ssub.s32 %s38, %s45
      %p249 = scmp.eq.s32.totalorder %s248, 0
      %s251 = sadd.s32 %s250, 1
      %s252 = scalar_select %p249, %s250, %s251
      %p255 = pneg %p249
      %p256 = scmp.eq.s32.totalorder %s30, 3
      %p257 = por %p255, %p256
      %p258 = scmp.ne.s32.totalorder %s250, %s253
      %p259 = scmp.eq.s32.totalorder %s30, 0
      %p260 = por %p258, %p259
      %p261 = scmp.ne.s32.totalorder %s250, %s253
      %p262 = scmp.eq.s32.totalorder %s35, 3
      %p263 = por %p261, %p262
      %p264 = scmp.ne.s32.totalorder %s253, %s254
      %p265 = scmp.eq.s32.totalorder %s35, 0
      %p266 = por %p264, %p265
      %p267 = scmp.ne.s32.totalorder %s253, %s254
      %p268 = scmp.eq.s32.totalorder %s36, 3
      %p269 = por %p267, %p268
      %p271 = scmp.ne.s32.totalorder %s254, %s270
      %p272 = scmp.eq.s32.totalorder %s36, 0
      %p273 = por %p271, %p272
      %s274 = ssub.s32 %s38, %s45
      %p275 = scmp.eq.s32.totalorder %s274, 0
      %s277 = sadd.s32 %s276, 1
      %s278 = scalar_select %p275, %s276, %s277
      %p281 = pneg %p275
      %p282 = scmp.eq.s32.totalorder %s30, 3
      %p283 = por %p281, %p282
      %p284 = scmp.ne.s32.totalorder %s276, %s279
      %p285 = scmp.eq.s32.totalorder %s30, 0
      %p286 = por %p284, %p285
      %p287 = scmp.ne.s32.totalorder %s276, %s279
      %p288 = scmp.eq.s32.totalorder %s35, 3
      %p289 = por %p287, %p288
      %p290 = scmp.ne.s32.totalorder %s279, %s280
      %p291 = scmp.eq.s32.totalorder %s35, 0
      %p292 = por %p290, %p291
      %p293 = scmp.ne.s32.totalorder %s279, %s280
      %p294 = scmp.eq.s32.totalorder %s36, 3
      %p295 = por %p293, %p294
      %p297 = scmp.ne.s32.totalorder %s280, %s296
      %p298 = scmp.eq.s32.totalorder %s36, 0
      %p299 = por %p297, %p298
      %s300 = ssub.s32 %s38, %s45
      %p301 = scmp.eq.s32.totalorder %s300, 0
      %s303 = sadd.s32 %s302, 1
      %s304 = scalar_select %p301, %s302, %s303
      %p307 = pneg %p301
      %p308 = scmp.eq.s32.totalorder %s30, 3
      %p309 = por %p307, %p308
      %p310 = scmp.ne.s32.totalorder %s302, %s305
      %p311 = scmp.eq.s32.totalorder %s30, 0
      %p312 = por %p310, %p311
      %p313 = scmp.ne.s32.totalorder %s302, %s305
      %p314 = scmp.eq.s32.totalorder %s35, 3
      %p315 = por %p313, %p314
      %p316 = scmp.ne.s32.totalorder %s305, %s306
      %p317 = scmp.eq.s32.totalorder %s35, 0
      %p318 = por %p316, %p317
      %p319 = scmp.ne.s32.totalorder %s305, %s306
      %p320 = scmp.eq.s32.totalorder %s36, 3
      %p321 = por %p319, %p320
      %p323 = scmp.ne.s32.totalorder %s306, %s322
      %p324 = scmp.eq.s32.totalorder %s36, 0
      %p325 = por %p323, %p324
      %s326 = ssub.s32 %s38, %s45
      %p327 = scmp.eq.s32.totalorder %s326, 0
      %s329 = sadd.s32 %s328, 1
      %s330 = scalar_select %p327, %s328, %s329
      %p333 = pneg %p327
      %p334 = scmp.eq.s32.totalorder %s30, 3
      %p335 = por %p333, %p334
      %p336 = scmp.ne.s32.totalorder %s328, %s331
      %p337 = scmp.eq.s32.totalorder %s30, 0
      %p338 = por %p336, %p337
      %p339 = scmp.ne.s32.totalorder %s328, %s331
      %p340 = scmp.eq.s32.totalorder %s35, 3
      %p341 = por %p339, %p340
      %p342 = scmp.ne.s32.totalorder %s331, %s332
      %p343 = scmp.eq.s32.totalorder %s35, 0
      %p344 = por %p342, %p343
      %p345 = scmp.ne.s32.totalorder %s331, %s332
      %p346 = scmp.eq.s32.totalorder %s36, 3
      %p347 = por %p345, %p346
      %p349 = scmp.ne.s32.totalorder %s332, %s348
      %p350 = scmp.eq.s32.totalorder %s36, 0
      %p351 = por %p349, %p350
      %s352 = ssub.s32 %s38, %s45
      %p353 = scmp.eq.s32.totalorder %s352, 0
      %s355 = sadd.s32 %s354, 1
      %s356 = scalar_select %p353, %s354, %s355
      %p359 = pneg %p353
      %p360 = scmp.eq.s32.totalorder %s30, 3
      %p361 = por %p359, %p360
      %p362 = scmp.ne.s32.totalorder %s354, %s357
      %p363 = scmp.eq.s32.totalorder %s30, 0
      %p364 = por %p362, %p363
      %p365 = scmp.ne.s32.totalorder %s354, %s357
      %p366 = scmp.eq.s32.totalorder %s35, 3
      %p367 = por %p365, %p366
      %p368 = scmp.ne.s32.totalorder %s357, %s358
      %p369 = scmp.eq.s32.totalorder %s35, 0
      %p370 = por %p368, %p369
      %p371 = scmp.ne.s32.totalorder %s357, %s358
      %p372 = scmp.eq.s32.totalorder %s36, 3
      %p373 = por %p371, %p372
      %p375 = scmp.ne.s32.totalorder %s358, %s374
      %p376 = scmp.eq.s32.totalorder %s36, 0
      %p377 = por %p375, %p376
      %s378 = ssub.s32 %s38, %s45
      %p379 = scmp.eq.s32.totalorder %s378, 0
      %s381 = sadd.s32 %s380, 1
      %s382 = scalar_select %p379, %s380, %s381
      %p385 = pneg %p379
      %p386 = scmp.eq.s32.totalorder %s30, 3
      %p387 = por %p385, %p386
      %p388 = scmp.ne.s32.totalorder %s380, %s383
      %p389 = scmp.eq.s32.totalorder %s30, 0
      %p390 = por %p388, %p389
      %p391 = scmp.ne.s32.totalorder %s380, %s383
      %p392 = scmp.eq.s32.totalorder %s35, 3
      %p393 = por %p391, %p392
      %p394 = scmp.ne.s32.totalorder %s383, %s384
      %p395 = scmp.eq.s32.totalorder %s35, 0
      %p396 = por %p394, %p395
      %p397 = scmp.ne.s32.totalorder %s383, %s384
      %p398 = scmp.eq.s32.totalorder %s36, 3
      %p399 = por %p397, %p398
      %p401 = scmp.ne.s32.totalorder %s384, %s400
      %p402 = scmp.eq.s32.totalorder %s36, 0
      %p403 = por %p401, %p402
      %s404 = ssub.s32 %s38, %s45
      %p405 = scmp.eq.s32.totalorder %s404, 0
      %s407 = sadd.s32 %s406, 1
      %s408 = scalar_select %p405, %s406, %s407
      %p411 = pneg %p405
      %p412 = scmp.eq.s32.totalorder %s30, 3
      %p413 = por %p411, %p412
      %p414 = scmp.ne.s32.totalorder %s406, %s409
      %p415 = scmp.eq.s32.totalorder %s30, 0
      %p416 = por %p414, %p415
      %p417 = scmp.ne.s32.totalorder %s406, %s409
      %p418 = scmp.eq.s32.totalorder %s35, 3
      %p419 = por %p417, %p418
      %p420 = scmp.ne.s32.totalorder %s409, %s410
      %p421 = scmp.eq.s32.totalorder %s35, 0
      %p422 = por %p420, %p421
      %p423 = scmp.ne.s32.totalorder %s409, %s410
      %p424 = scmp.eq.s32.totalorder %s36, 3
      %p425 = por %p423, %p424
      %p427 = scmp.ne.s32.totalorder %s410, %s426
      %p428 = scmp.eq.s32.totalorder %s36, 0
      %p429 = por %p427, %p428
      %s430 = ssub.s32 %s38, %s45
      %p431 = scmp.eq.s32.totalorder %s430, 0
      %s433 = sadd.s32 %s432, 1
      %s434 = scalar_select %p431, %s432, %s433
      %p437 = pneg %p431
      %p438 = scmp.eq.s32.totalorder %s30, 3
      %p439 = por %p437, %p438
      %p440 = scmp.ne.s32.totalorder %s432, %s435
      %p441 = scmp.eq.s32.totalorder %s30, 0
      %p442 = por %p440, %p441
      %p443 = scmp.ne.s32.totalorder %s432, %s435
      %p444 = scmp.eq.s32.totalorder %s35, 3
      %p445 = por %p443, %p444
      %p446 = scmp.ne.s32.totalorder %s435, %s436
      %p447 = scmp.eq.s32.totalorder %s35, 0
      %p448 = por %p446, %p447
      %p449 = scmp.ne.s32.totalorder %s435, %s436
      %p450 = scmp.eq.s32.totalorder %s36, 3
      %p451 = por %p449, %p450
      %p453 = scmp.ne.s32.totalorder %s436, %s452
      %p454 = scmp.eq.s32.totalorder %s36, 0
      %p455 = por %p453, %p454
      %s456 = ssub.s32 %s38, %s45
      %p457 = scmp.eq.s32.totalorder %s456, 0
      %s459 = sadd.s32 %s458, 1
      %s460 = scalar_select %p457, %s458, %s459
      %p463 = pneg %p457
      %p464 = scmp.eq.s32.totalorder %s30, 3
      %p465 = por %p463, %p464
      %p466 = scmp.ne.s32.totalorder %s458, %s461
      %p467 = scmp.eq.s32.totalorder %s30, 0
      %p468 = por %p466, %p467
      %p469 = scmp.ne.s32.totalorder %s458, %s461
      %p470 = scmp.eq.s32.totalorder %s35, 3
      %p471 = por %p469, %p470
      %p472 = scmp.ne.s32.totalorder %s461, %s462
      %p473 = scmp.eq.s32.totalorder %s35, 0
      %p474 = por %p472, %p473
      %p475 = scmp.ne.s32.totalorder %s461, %s462
      %p476 = scmp.eq.s32.totalorder %s36, 3
      %p477 = por %p475, %p476
      %p479 = scmp.ne.s32.totalorder %s462, %s478
      %p480 = scmp.eq.s32.totalorder %s36, 0
      %p481 = por %p479, %p480
      %s483 = sadd.s32 %s482, 1
      %p486 = scmp.eq.s32.totalorder %s30, 3
      %p487 = scmp.ne.s32.totalorder %s482, %s484
      %p488 = scmp.eq.s32.totalorder %s30, 0
      %p489 = por %p487, %p488
      %p490 = scmp.ne.s32.totalorder %s482, %s484
      %p491 = scmp.eq.s32.totalorder %s35, 3
      %p492 = por %p490, %p491
      %p493 = scmp.ne.s32.totalorder %s484, %s485
      %p494 = scmp.eq.s32.totalorder %s35, 0
      %p495 = por %p493, %p494
      %p496 = scmp.ne.s32.totalorder %s484, %s485
      %p497 = scmp.eq.s32.totalorder %s36, 3
      %p498 = por %p496, %p497
      %p500 = scmp.ne.s32.totalorder %s485, %s499
      %p501 = scmp.eq.s32.totalorder %s36, 0
      %p502 = por %p500, %p501
      %s504 = sadd.s32 %s503, 1
      %p507 = scmp.eq.s32.totalorder %s30, 3
      %p508 = scmp.ne.s32.totalorder %s503, %s505
      %p509 = scmp.eq.s32.totalorder %s30, 0
      %p510 = por %p508, %p509
      %p511 = scmp.ne.s32.totalorder %s503, %s505
      %p512 = scmp.eq.s32.totalorder %s35, 3
      %p513 = por %p511, %p512
      %p514 = scmp.ne.s32.totalorder %s505, %s506
      %p515 = scmp.eq.s32.totalorder %s35, 0
      %p516 = por %p514, %p515
      %p517 = scmp.ne.s32.totalorder %s505, %s506
      %p518 = scmp.eq.s32.totalorder %s36, 3
      %p519 = por %p517, %p518
      %p521 = scmp.ne.s32.totalorder %s506, %s520
      %p522 = scmp.eq.s32.totalorder %s36, 0
      %p523 = por %p521, %p522
      %s525 = sadd.s32 %s524, 1
      %p528 = scmp.eq.s32.totalorder %s30, 3
      %p529 = scmp.ne.s32.totalorder %s524, %s526
      %p530 = scmp.eq.s32.totalorder %s30, 0
      %p531 = por %p529, %p530
      %p532 = scmp.ne.s32.totalorder %s524, %s526
      %p533 = scmp.eq.s32.totalorder %s35, 3
      %p534 = por %p532, %p533
      %p535 = scmp.ne.s32.totalorder %s526, %s527
      %p536 = scmp.eq.s32.totalorder %s35, 0
      %p537 = por %p535, %p536
      %p538 = scmp.ne.s32.totalorder %s526, %s527
      %p539 = scmp.eq.s32.totalorder %s36, 3
      %p540 = por %p538, %p539
      %p542 = scmp.ne.s32.totalorder %s527, %s541
      %p543 = scmp.eq.s32.totalorder %s36, 0
      %p544 = por %p542, %p543
      %s546 = sadd.s32 %s545, 1
      %p549 = scmp.eq.s32.totalorder %s30, 3
      %p550 = scmp.ne.s32.totalorder %s545, %s547
      %p551 = scmp.eq.s32.totalorder %s30, 0
      %p552 = por %p550, %p551
      %p553 = scmp.ne.s32.totalorder %s545, %s547
      %p554 = scmp.eq.s32.totalorder %s35, 3
      %p555 = por %p553, %p554
      %p556 = scmp.ne.s32.totalorder %s547, %s548
      %p557 = scmp.eq.s32.totalorder %s35, 0
      %p558 = por %p556, %p557
      %p559 = scmp.ne.s32.totalorder %s547, %s548
      %p560 = scmp.eq.s32.totalorder %s36, 3
      %p561 = por %p559, %p560
      %p563 = scmp.ne.s32.totalorder %s548, %s562
      %p564 = scmp.eq.s32.totalorder %s36, 0
      %p565 = por %p563, %p564
      %s566 = ssub.s32 %s37, %s49
      %p567 = scmp.eq.s32.totalorder %s566, 0
      %s569 = sadd.s32 %s568, 1
      %s570 = scalar_select %p567, %s568, %s569
      %p573 = pneg %p567
      %p574 = scmp.eq.s32.totalorder %s30, 3
      %p575 = por %p573, %p574
      %p576 = scmp.ne.s32.totalorder %s568, %s571
      %p577 = scmp.eq.s32.totalorder %s30, 0
      %p578 = por %p576, %p577
      %p579 = scmp.ne.s32.totalorder %s568, %s571
      %p580 = scmp.eq.s32.totalorder %s35, 3
      %p581 = por %p579, %p580
      %p582 = scmp.ne.s32.totalorder %s571, %s572
      %p583 = scmp.eq.s32.totalorder %s35, 0
      %p584 = por %p582, %p583
      %p585 = scmp.ne.s32.totalorder %s571, %s572
      %p586 = scmp.eq.s32.totalorder %s36, 3
      %p587 = por %p585, %p586
      %p589 = scmp.ne.s32.totalorder %s572, %s588
      %p590 = scmp.eq.s32.totalorder %s36, 0
      %p591 = por %p589, %p590
      %p592 = scmp.le.s32.totalorder 1, %s30
      %p593 = scmp.lt.s32.totalorder %s30, 5
      %p594 = pnand %p592, %p593
      %p595 = pneg %p594
      // Predicated region
      $region9: #{sbert_forward.1} parent=5 // pred_check
        _
      $region10: #{sbert_forward.1} parent=5 // pred_check_branch
        %597 = sbr.rel (%p594) target = $region12
      $region11: #{sbert_forward.1} parent=5 // pred_region
        %s598 = ssub.s32 %s30, 1
        // Predicated region
        $region13: #{sbert_forward.1} parent=11 // pred_check
          %p599 = pneg %p141
        $region14: #{sbert_forward.1} parent=11 // pred_check_branch
          %601 = sbr.rel (%p599) target = $region16
        $region15: #{sbert_forward.1} parent=11 // pred_region
          _
        $region16: #{sbert_forward.1} parent=11 // pred_fallthru
          _
        // Predicated region
        $region17: #{sbert_forward.1} parent=11 // pred_check
          %p602 = pneg %p162
        $region18: #{sbert_forward.1} parent=11 // pred_check_branch
          %604 = sbr.rel (%p602) target = $region20
        $region19: #{sbert_forward.1} parent=11 // pred_region
          _
        $region20: #{sbert_forward.1} parent=11 // pred_fallthru
          _
        // Predicated region
        $region21: #{sbert_forward.1} parent=11 // pred_check
          %p605 = pneg %p495
        $region22: #{sbert_forward.1} parent=11 // pred_check_branch
          %607 = sbr.rel (%p605) target = $region24
        $region23: #{sbert_forward.1} parent=11 // pred_region
          _
        $region24: #{sbert_forward.1} parent=11 // pred_fallthru
          _
        // Predicated region
        $region25: #{sbert_forward.1} parent=11 // pred_check
          %p608 = pneg %p516
        $region26: #{sbert_forward.1} parent=11 // pred_check_branch
          %610 = sbr.rel (%p608) target = $region28
        $region27: #{sbert_forward.1} parent=11 // pred_region
          _
        $region28: #{sbert_forward.1} parent=11 // pred_fallthru
          _
        // Predicated region
        $region29: #{sbert_forward.1} parent=11 // pred_check
          %p611 = pneg %p537
        $region30: #{sbert_forward.1} parent=11 // pred_check_branch
          %613 = sbr.rel (%p611) target = $region32
        $region31: #{sbert_forward.1} parent=11 // pred_region
          _
        $region32: #{sbert_forward.1} parent=11 // pred_fallthru
          _
        // Predicated region
        $region33: #{sbert_forward.1} parent=11 // pred_check
          %p614 = pneg %p558
        $region34: #{sbert_forward.1} parent=11 // pred_check_branch
          %616 = sbr.rel (%p614) target = $region36
        $region35: #{sbert_forward.1} parent=11 // pred_region
          _
        $region36: #{sbert_forward.1} parent=11 // pred_fallthru
          _
      $region12: #{sbert_forward.1} parent=5 // pred_fallthru
        _
      %p617 = scmp.lt.s32.totalorder %s30, 4
      // Predicated region
      $region37: #{sbert_forward.1} parent=5 // pred_check
        %p618 = pneg %p617
      $region38: #{sbert_forward.1} parent=5 // pred_check_branch
        %620 = sbr.rel (%p618) target = $region40
      $region39: #{sbert_forward.1} parent=5 // pred_region
        // Predicated region
        $region41: #{sbert_forward.1} parent=39 // pred_check
          %p621 = pneg %p62
        $region42: #{sbert_forward.1} parent=39 // pred_check_branch
          %623 = sbr.rel (%p621) target = $region44
        $region43: #{sbert_forward.1} parent=39 // pred_region
          %p624 = scmp.lt.s32.totalorder %s37, 1
          %s625 = scalar_select %p624, %s37, 1
          %s626 = smul.addr %s625, 8
          %s627 = scalar_lea.vmem %s0, %s626
        $region44: #{sbert_forward.1} parent=39 // pred_fallthru
          _
        // Predicated region
        $region45: #{sbert_forward.1} parent=39 // pred_check
          %p628 = pneg %p88
        $region46: #{sbert_forward.1} parent=39 // pred_check_branch
          %630 = sbr.rel (%p628) target = $region48
        $region47: #{sbert_forward.1} parent=39 // pred_region
          %p631 = scmp.lt.s32.totalorder %s37, 1
          %s632 = scalar_select %p631, %s37, 1
          %s633 = scalar_lea.vmem %s1, %s632
        $region48: #{sbert_forward.1} parent=39 // pred_fallthru
          _
        // Predicated region
        $region49: #{sbert_forward.1} parent=39 // pred_check
          %p634 = pneg %p114
        $region50: #{sbert_forward.1} parent=39 // pred_check_branch
          %636 = sbr.rel (%p634) target = $region52
        $region51: #{sbert_forward.1} parent=39 // pred_region
          %p637 = scmp.lt.s32.totalorder %s37, 1
          %s638 = scalar_select %p637, %s37, 1
          %s639 = smul.addr %s638, 8
          %s640 = scalar_lea.vmem %s2, %s639
        $region52: #{sbert_forward.1} parent=39 // pred_fallthru
          _
        // Predicated region
        $region53: #{sbert_forward.1} parent=39 // pred_check
          %p641 = pneg %p182
        $region54: #{sbert_forward.1} parent=39 // pred_check_branch
          %643 = sbr.rel (%p641) target = $region56
        $region55: #{sbert_forward.1} parent=39 // pred_region
          %p644 = scmp.lt.s32.totalorder %s38, 1
          %s645 = scalar_select %p644, %s38, 1
          %s646 = smul.addr %s645, 4
          %s647 = smul.addr %s646, 4
          %s648 = scalar_lea.vmem %s5, %s647
        $region56: #{sbert_forward.1} parent=39 // pred_fallthru
          _
        // Predicated region
        $region57: #{sbert_forward.1} parent=39 // pred_check
          %p649 = pneg %p208
        $region58: #{sbert_forward.1} parent=39 // pred_check_branch
          %651 = sbr.rel (%p649) target = $region60
        $region59: #{sbert_forward.1} parent=39 // pred_region
          %p652 = scmp.lt.s32.totalorder %s38, 1
          %s653 = scalar_select %p652, %s38, 1
          %s654 = scalar_lea.vmem %s6, %s653
        $region60: #{sbert_forward.1} parent=39 // pred_fallthru
          _
        // Predicated region
        $region61: #{sbert_forward.1} parent=39 // pred_check
          %p655 = pneg %p234
        $region62: #{sbert_forward.1} parent=39 // pred_check_branch
          %657 = sbr.rel (%p655) target = $region64
        $region63: #{sbert_forward.1} parent=39 // pred_region
          %p658 = scmp.lt.s32.totalorder %s38, 1
          %s659 = scalar_select %p658, %s38, 1
          %s660 = smul.addr %s659, 4
          %s661 = smul.addr %s660, 4
          %s662 = scalar_lea.vmem %s7, %s661
        $region64: #{sbert_forward.1} parent=39 // pred_fallthru
          _
        // Predicated region
        $region65: #{sbert_forward.1} parent=39 // pred_check
          %p663 = pneg %p260
        $region66: #{sbert_forward.1} parent=39 // pred_check_branch
          %665 = sbr.rel (%p663) target = $region68
        $region67: #{sbert_forward.1} parent=39 // pred_region
          %p666 = scmp.lt.s32.totalorder %s38, 1
          %s667 = scalar_select %p666, %s38, 1
          %s668 = scalar_lea.vmem %s8, %s667
        $region68: #{sbert_forward.1} parent=39 // pred_fallthru
          _
        // Predicated region
        $region69: #{sbert_forward.1} parent=39 // pred_check
          %p669 = pneg %p286
        $region70: #{sbert_forward.1} parent=39 // pred_check_branch
          %671 = sbr.rel (%p669) target = $region72
        $region71: #{sbert_forward.1} parent=39 // pred_region
          %p672 = scmp.lt.s32.totalorder %s38, 1
          %s673 = scalar_select %p672, %s38, 1
          %s674 = scalar_lea.vmem %s9, %s673
        $region72: #{sbert_forward.1} parent=39 // pred_fallthru
          _
        // Predicated region
        $region73: #{sbert_forward.1} parent=39 // pred_check
          %p675 = pneg %p312
        $region74: #{sbert_forward.1} parent=39 // pred_check_branch
          %677 = sbr.rel (%p675) target = $region76
        $region75: #{sbert_forward.1} parent=39 // pred_region
          %p678 = scmp.lt.s32.totalorder %s38, 1
          %s679 = scalar_select %p678, %s38, 1
          %s680 = scalar_lea.vmem %s10, %s679
        $region76: #{sbert_forward.1} parent=39 // pred_fallthru
          _
        // Predicated region
        $region77: #{sbert_forward.1} parent=39 // pred_check
          %p681 = pneg %p338
        $region78: #{sbert_forward.1} parent=39 // pred_check_branch
          %683 = sbr.rel (%p681) target = $region80
        $region79: #{sbert_forward.1} parent=39 // pred_region
          %p684 = scmp.lt.s32.totalorder %s38, 1
          %s685 = scalar_select %p684, %s38, 1
          %s686 = smul.addr %s685, 4
          %s687 = smul.addr %s686, 4
          %s688 = scalar_lea.vmem %s11, %s687
        $region80: #{sbert_forward.1} parent=39 // pred_fallthru
          _
        // Predicated region
        $region81: #{sbert_forward.1} parent=39 // pred_check
          %p689 = pneg %p364
        $region82: #{sbert_forward.1} parent=39 // pred_check_branch
          %691 = sbr.rel (%p689) target = $region84
        $region83: #{sbert_forward.1} parent=39 // pred_region
          %p692 = scmp.lt.s32.totalorder %s38, 1
          %s693 = scalar_select %p692, %s38, 1
          %s694 = scalar_lea.vmem %s12, %s693
        $region84: #{sbert_forward.1} parent=39 // pred_fallthru
          _
        // Predicated region
        $region85: #{sbert_forward.1} parent=39 // pred_check
          %p695 = pneg %p390
        $region86: #{sbert_forward.1} parent=39 // pred_check_branch
          %697 = sbr.rel (%p695) target = $region88
        $region87: #{sbert_forward.1} parent=39 // pred_region
          %p698 = scmp.lt.s32.totalorder %s38, 1
          %s699 = scalar_select %p698, %s38, 1
          %s700 = smul.addr %s699, 8
          %s701 = smul.addr %s700, 4
          %s702 = scalar_lea.vmem %s13, %s701
        $region88: #{sbert_forward.1} parent=39 // pred_fallthru
          _
        // Predicated region
        $region89: #{sbert_forward.1} parent=39 // pred_check
          %p703 = pneg %p416
        $region90: #{sbert_forward.1} parent=39 // pred_check_branch
          %705 = sbr.rel (%p703) target = $region92
        $region91: #{sbert_forward.1} parent=39 // pred_region
          %p706 = scmp.lt.s32.totalorder %s38, 1
          %s707 = scalar_select %p706, %s38, 1
          %s708 = scalar_lea.vmem %s14, %s707
        $region92: #{sbert_forward.1} parent=39 // pred_fallthru
          _
        // Predicated region
        $region93: #{sbert_forward.1} parent=39 // pred_check
          %p709 = pneg %p442
        $region94: #{sbert_forward.1} parent=39 // pred_check_branch
          %711 = sbr.rel (%p709) target = $region96
        $region95: #{sbert_forward.1} parent=39 // pred_region
          %p712 = scmp.lt.s32.totalorder %s38, 1
          %s713 = scalar_select %p712, %s38, 1
          %s714 = scalar_lea.vmem %s15, %s713
        $region96: #{sbert_forward.1} parent=39 // pred_fallthru
          _
        // Predicated region
        $region97: #{sbert_forward.1} parent=39 // pred_check
          %p715 = pneg %p468
        $region98: #{sbert_forward.1} parent=39 // pred_check_branch
          %717 = sbr.rel (%p715) target = $region100
        $region99: #{sbert_forward.1} parent=39 // pred_region
          %p718 = scmp.lt.s32.totalorder %s38, 1
          %s719 = scalar_select %p718, %s38, 1
          %s720 = scalar_lea.vmem %s16, %s719
        $region100: #{sbert_forward.1} parent=39 // pred_fallthru
          _
      $region40: #{sbert_forward.1} parent=5 // pred_fallthru
        _
      %p721 = scmp.le.s32.totalorder 1, %s30
      %p722 = scmp.lt.s32.totalorder %s30, 5
      %p723 = pnand %p721, %p722
      %p724 = pneg %p723
      // Predicated region
      $region101: #{sbert_forward.1} parent=5 // pred_check
        _
      $region102: #{sbert_forward.1} parent=5 // pred_check_branch
        %726 = sbr.rel (%p723) target = $region104
      $region103: #{sbert_forward.1} parent=5 // pred_region
        %s727 = ssub.s32 %s30, 1
        %p728 = scmp.lt.s32.totalorder %s39, 1
        %s729 = scalar_select %p728, %s39, 1
        %s730 = smul.addr %s729, 8
        %s731 = scalar_lea.vmem %s0, %s730
        %p732 = pneg %p68
        %p733 = pneg %p65
        %p734 = scmp.lt.s32.totalorder %s39, 1
        %s735 = scalar_select %p734, %s39, 1
        %s736 = scalar_lea.vmem %s1, %s735
        %p737 = pneg %p94
        %p738 = pneg %p91
        %p739 = scmp.lt.s32.totalorder %s39, 1
        %s740 = scalar_select %p739, %s39, 1
        %s741 = smul.addr %s740, 8
        %s742 = scalar_lea.vmem %s2, %s741
        %p743 = pneg %p120
        %p744 = pneg %p117
        %p745 = pneg %p141
        %p746 = pneg %p138
        %p747 = pneg %p162
        %p748 = pneg %p159
        %p749 = scmp.lt.s32.totalorder %s40, 1
        %s750 = scalar_select %p749, %s40, 1
        %s751 = smul.addr %s750, 4
        %s752 = smul.addr %s751, 4
        %s753 = scalar_lea.vmem %s5, %s752
        %p754 = pneg %p188
        %p755 = pneg %p185
        %p756 = scmp.lt.s32.totalorder %s40, 1
        %s757 = scalar_select %p756, %s40, 1
        %s758 = scalar_lea.vmem %s6, %s757
        %p759 = pneg %p214
        %p760 = pneg %p211
        %p761 = scmp.lt.s32.totalorder %s40, 1
        %s762 = scalar_select %p761, %s40, 1
        %s763 = smul.addr %s762, 4
        %s764 = smul.addr %s763, 4
        %s765 = scalar_lea.vmem %s7, %s764
        %p766 = pneg %p240
        %p767 = pneg %p237
        %p768 = scmp.lt.s32.totalorder %s40, 1
        %s769 = scalar_select %p768, %s40, 1
        %s770 = scalar_lea.vmem %s8, %s769
        %p771 = pneg %p266
        %p772 = pneg %p263
        %p773 = scmp.lt.s32.totalorder %s40, 1
        %s774 = scalar_select %p773, %s40, 1
        %s775 = scalar_lea.vmem %s9, %s774
        %p776 = pneg %p292
        %p777 = pneg %p289
        %p778 = scmp.lt.s32.totalorder %s40, 1
        %s779 = scalar_select %p778, %s40, 1
        %s780 = scalar_lea.vmem %s10, %s779
        %p781 = pneg %p318
        %p782 = pneg %p315
        %p783 = scmp.lt.s32.totalorder %s40, 1
        %s784 = scalar_select %p783, %s40, 1
        %s785 = smul.addr %s784, 4
        %s786 = smul.addr %s785, 4
        %s787 = scalar_lea.vmem %s11, %s786
        %p788 = pneg %p344
        %p789 = pneg %p341
        %p790 = scmp.lt.s32.totalorder %s40, 1
        %s791 = scalar_select %p790, %s40, 1
        %s792 = scalar_lea.vmem %s12, %s791
        %p793 = pneg %p370
        %p794 = pneg %p367
        %p795 = scmp.lt.s32.totalorder %s40, 1
        %s796 = scalar_select %p795, %s40, 1
        %s797 = smul.addr %s796, 8
        %s798 = smul.addr %s797, 4
        %s799 = scalar_lea.vmem %s13, %s798
        %p800 = pneg %p396
        %p801 = pneg %p393
        %p802 = scmp.lt.s32.totalorder %s40, 1
        %s803 = scalar_select %p802, %s40, 1
        %s804 = scalar_lea.vmem %s14, %s803
        %p805 = pneg %p422
        %p806 = pneg %p419
        %p807 = scmp.lt.s32.totalorder %s40, 1
        %s808 = scalar_select %p807, %s40, 1
        %s809 = scalar_lea.vmem %s15, %s808
        %p810 = pneg %p448
        %p811 = pneg %p445
        %p812 = scmp.lt.s32.totalorder %s40, 1
        %s813 = scalar_select %p812, %s40, 1
        %s814 = scalar_lea.vmem %s16, %s813
        %p815 = pneg %p474
        %p816 = pneg %p471
        %p817 = pneg %p495
        %p818 = pneg %p492
        %p819 = pneg %p516
        %p820 = pneg %p513
        %p821 = pneg %p537
        %p822 = pneg %p534
        %p823 = pneg %p558
        %p824 = pneg %p555
        %p825 = pneg %p584
        %p826 = pneg %p581
        %s827 = sand.u32 %s571, 1
        %s828 = scalar_lea.sflag [#allocation4], %s827
        %s829 = sand.u32 %s571, 1
        %s830 = scalar_lea.vmem [#allocation3], %s829
        %p831 = scmp.lt.s32.totalorder %s39, 1
        %s832 = scalar_select %p831, %s39, 1
        %s833 = smul.addr %s832, 8
        %s834 = scalar_lea.vmem %s0, %s833
        %p835 = scmp.lt.s32.totalorder %s39, 1
        %s836 = scalar_select %p835, %s39, 1
        %s837 = scalar_lea.vmem %s1, %s836
        %p838 = scmp.lt.s32.totalorder %s39, 1
        %s839 = scalar_select %p838, %s39, 1
        %s840 = smul.addr %s839, 8
        %s841 = scalar_lea.vmem %s2, %s840
        %p842 = scmp.lt.s32.totalorder %s40, 1
        %s843 = scalar_select %p842, %s40, 1
        %s844 = smul.addr %s843, 4
        %s845 = smul.addr %s844, 4
        %s846 = scalar_lea.vmem %s5, %s845
        %p847 = scmp.lt.s32.totalorder %s40, 1
        %s848 = scalar_select %p847, %s40, 1
        %s849 = scalar_lea.vmem %s6, %s848
        %p850 = scmp.lt.s32.totalorder %s40, 1
        %s851 = scalar_select %p850, %s40, 1
        %s852 = smul.addr %s851, 4
        %s853 = smul.addr %s852, 4
        %s854 = scalar_lea.vmem %s7, %s853
        %p855 = scmp.lt.s32.totalorder %s40, 1
        %s856 = scalar_select %p855, %s40, 1
        %s857 = scalar_lea.vmem %s8, %s856
        %p858 = scmp.lt.s32.totalorder %s40, 1
        %s859 = scalar_select %p858, %s40, 1
        %s860 = scalar_lea.vmem %s9, %s859
        %p861 = scmp.lt.s32.totalorder %s40, 1
        %s862 = scalar_select %p861, %s40, 1
        %s863 = scalar_lea.vmem %s10, %s862
        %p864 = scmp.lt.s32.totalorder %s40, 1
        %s865 = scalar_select %p864, %s40, 1
        %s866 = smul.addr %s865, 4
        %s867 = smul.addr %s866, 4
        %s868 = scalar_lea.vmem %s11, %s867
        %p869 = scmp.lt.s32.totalorder %s40, 1
        %s870 = scalar_select %p869, %s40, 1
        %s871 = scalar_lea.vmem %s12, %s870
        %p872 = scmp.lt.s32.totalorder %s40, 1
        %s873 = scalar_select %p872, %s40, 1
        %s874 = smul.addr %s873, 8
        %s875 = smul.addr %s874, 4
        %s876 = scalar_lea.vmem %s13, %s875
        %p877 = scmp.lt.s32.totalorder %s40, 1
        %s878 = scalar_select %p877, %s40, 1
        %s879 = scalar_lea.vmem %s14, %s878
        %p880 = scmp.lt.s32.totalorder %s40, 1
        %s881 = scalar_select %p880, %s40, 1
        %s882 = scalar_lea.vmem %s15, %s881
        %p883 = scmp.lt.s32.totalorder %s40, 1
        %s884 = scalar_select %p883, %s40, 1
        %s885 = scalar_lea.vmem %s16, %s884
        %p887 = scmp.eq.s32.totalorder %s40, 0
        // Predicated region
        $region105: #{sbert_forward.1} parent=103 // pred_check
          %p888 = pneg %p887
        $region106: #{sbert_forward.1} parent=103 // pred_check_branch
          %890 = sbr.rel (%p888) target = $region108
        $region107: #{sbert_forward.1} parent=103 // pred_region
          %v891 = vld [vmem:[%s834] sm:$0xff]
          %v892 = vld [vmem:[%s3] sm:$0x1]
          %v893 = vld [vmem:[%s4] sm:$0x1]
          %vm894 = vcmask 261120
          %v895 = vsel %vm894, %v891, 0.0
          %896 = vadd.xlane.f32.xlu0 %v895
          %v897 = vpop.xlane.xlu0 %896
          %v898 = vrcp.pop 32.0
          %v899 = vmul.f32 %v897, %v898
          %v900 = vsub.f32 %v891, %v899
          %v901 = vmul.f32 %v900, %v900
          %v902 = vsel %vm894, %v901, 0.0
          %903 = vadd.xlane.f32.xlu0 %v902
          %v904 = vpop.xlane.xlu0 %903
          %v905 = vmul.f32 %v904, %v898
          %v906 = vadd.f32 %v905, 1e-12
          %v907 = vrsqrt.pop %v906
          %v908 = vmul.f32 %v900, %v907
          %v910 = vlaneseq
          %v911 = vshrl.u32 %v910, 7
          %v912 = vsub.s32 0, %v911
          %v913 = vrot.slane %v892, %v912
          %v915 = vmul.f32 %v908, %v913
          %v917 = vlaneseq
          %v918 = vshrl.u32 %v917, 7
          %v919 = vsub.s32 0, %v918
          %v920 = vrot.slane %v893, %v919
          %v922 = vadd.f32 %v915, %v920
          %923 = vst.msk [vmem:[#allocation2] sm:$0xff] %vm894, %v922
        $region108: #{sbert_forward.1} parent=103 // pred_fallthru
          _
        %v924 = vld [vmem:[#allocation2] sm:$0xff]
        %v925 = vpack.c.bf16 %v924, %v924
        %v926 = vld [vmem:[%s837] sm:$0x1]
        %v927 = vld [vmem:[%s846] sm:$0xf]
        %v928 = vld [vmem:[%s846 + $0x4] sm:$0xf]
        %v929 = vld [vmem:[%s846 + $0x8] sm:$0xf]
        %v930 = vld [vmem:[%s846 + $0xc] sm:$0xf]
        %v931 = vld [vmem:[%s849] sm:$0x1]
        %v933 = vlaneseq
        %v934 = vshrl.u32 %v933, 7
        %v935 = vsub.s32 0, %v934
        %v936 = vrot.slane %v931, %v935
        %v942 = vunpack.c.l.b16 %v927
        %v943 = vunpack.c.l.b16 %v928
        %v944 = vunpack.c.l.b16 %v929
        %v945 = vunpack.c.l.b16 %v930
        %v946 = vpack.c.b16 %v943, %v942
        %v947 = vpack.c.b16 %v945, %v944
        %vm950 = vcmask 261120
        %v952 = vsel %vm950, %v925, 0
        %954 = vmatprep.subr.bf16.mxu0 0
        %955 = vmatpush1.bf16.msra.mxu0 0
        %956 = vmatprep.subr.bf16.mxu0 0
        %957 = vmatpush1.bf16.msra.mxu0 0
        %958 = vmatprep.subr.bf16.mxu0 0
        %959 = vmatpush1.bf16.msra.mxu0 0
        %960 = vmatprep.subr.bf16.mxu0 0
        %961 = vmatpush1.bf16.msra.mxu0 0
        %962 = vmatprep.subr.bf16.mxu0 0
        %963 = vmatpush1.bf16.msra.mxu0 0
        %964 = vmatprep.subr.bf16.mxu0 0
        %965 = vmatpush1.bf16.msra.mxu0 0
        %966 = vmatprep.subr.bf16.mxu0 0
        %967 = vmatpush1.bf16.msra.mxu0 %v947
        %968 = vmatprep.subr.bf16.mxu0 0
        %969 = vmatpush1.bf16.msra.mxu0 %v946
        %970 = vmatprep.subr.bf16.mxu0 0
        %971 = vmatpush2.bf16.msra.mxu0 0
        %972 = vmatprep.subr.bf16.mxu0 0
        %973 = vmatpush2.bf16.msra.mxu0 0
        %974 = vmatprep.subr.bf16.mxu0 0
        %975 = vmatpush2.bf16.msra.mxu0 0
        %976 = vmatprep.subr.bf16.mxu0 0
        %977 = vmatpush2.bf16.msra.mxu0 0
        %978 = vmatprep.subr.bf16.mxu0 0
        %979 = vmatpush2.bf16.msra.mxu0 0
        %980 = vmatprep.subr.bf16.mxu0 0
        %981 = vmatpush2.bf16.msra.mxu0 0
        %982 = vmatprep.subr.bf16.mxu0 0
        %983 = vmatpush2.bf16.msra.mxu0 0
        %984 = vmatprep.subr.bf16.mxu0 0
        %985 = vmatpush2.bf16.msra.mxu0 0
        %986 = vmatprep.mubr.bf16.mxu0 0
        %987 = vmatmul.mubr.bf16.gmra.mxu0 %v952
        %v988 = vpop.f32.mrf.mxu0
        %v989 = vadd.f32 %v936, %v988
        %v990 = vpop.f32.mrf.mxu0
        %v991 = vpop.f32.mrf.mxu0
        %v992 = vpop.f32.mrf.mxu0
        %993 = vdwg.mxu0
        %v994 = vpack.c.bf16 %v989, %v989
        %v996 = vlaneseq
        %v997 = vshrl.u32 %v996, 7
        %v998 = vsub.s32 0, %v997
        %v999 = vrot.slane %v926, %v998
        %1002 = vrot.lane.b32.xlu0 %v994, 96
        %v1003 = vpop.permute.xlu0 %1002
        %vm1004 = vcmask 64512
        %v1006 = vsel %vm1004, %v994, 0
        %v1009 = vsel %vm1004, %v1003, 0
        %1011 = vmatprep.subr.bf16.mxu0 0
        %1012 = vmatpush1.bf16.xpose.msra.mxu0 0
        %1013 = vmatprep.subr.bf16.mxu0 0
        %1014 = vmatpush1.bf16.xpose.msra.mxu0 0
        %1015 = vmatprep.subr.bf16.mxu0 0
        %1016 = vmatpush1.bf16.xpose.msra.mxu0 0
        %1017 = vmatprep.subr.bf16.mxu0 0
        %1018 = vmatpush1.bf16.xpose.msra.mxu0 0
        %1019 = vmatprep.subr.bf16.mxu0 0
        %1020 = vmatpush1.bf16.xpose.msra.mxu0 0
        %1021 = vmatprep.subr.bf16.mxu0 0
        %1022 = vmatpush1.bf16.xpose.msra.mxu0 0
        %1023 = vmatprep.subr.bf16.mxu0 0
        %1024 = vmatpush1.bf16.xpose.msra.mxu0 0
        %1025 = vmatprep.subr.bf16.mxu0 0
        %1026 = vmatpush1.bf16.xpose.msra.mxu0 %v1009
        %1027 = vmatprep.subr.bf16.mxu0 0
        %1028 = vmatpush2.bf16.xpose.msra.mxu0 0
        %1029 = vmatprep.subr.bf16.mxu0 0
        %1030 = vmatpush2.bf16.xpose.msra.mxu0 0
        %1031 = vmatprep.subr.bf16.mxu0 0
        %1032 = vmatpush2.bf16.xpose.msra.mxu0 0
        %1033 = vmatprep.subr.bf16.mxu0 0
        %1034 = vmatpush2.bf16.xpose.msra.mxu0 0
        %1035 = vmatprep.subr.bf16.mxu0 0
        %1036 = vmatpush2.bf16.xpose.msra.mxu0 0
        %1037 = vmatprep.subr.bf16.mxu0 0
        %1038 = vmatpush2.bf16.xpose.msra.mxu0 0
        %1039 = vmatprep.subr.bf16.mxu0 0
        %1040 = vmatpush2.bf16.xpose.msra.mxu0 0
        %1041 = vmatprep.subr.bf16.mxu0 0
        %1042 = vmatpush2.bf16.xpose.msra.mxu0 0
        %1043 = vmatprep.mubr.bf16.mxu0 0
        %1044 = vmatmul.mubr.bf16.gmra.mxu0 %v1006
        %v1045 = vpop.f32.mrf.mxu0
        %v1046 = vadd.f32 %v999, %v1045
        %v1047 = vpop.f32.mrf.mxu0
        %v1048 = vpop.f32.mrf.mxu0
        %v1049 = vpop.f32.mrf.mxu0
        %1050 = vdwg.mxu0
        %v1051 = vsel %vm1004, %v1046, -inf
        %1052 = vmax.xlane.f32.xlu0 %v1051
        %v1053 = vpop.xlane.xlu0 %1052
        %v1054 = vsub.f32 %v1046, %v1053
        %v1055 = vmul.f32 %v1054, 1.442695
        %v1056 = vpow.pop %v1055
        %v1057 = vsel %vm1004, %v1056, 0.0
        %1058 = vadd.xlane.f32.xlu0 %v1057
        %v1059 = vpop.xlane.xlu0 %1058
        %v1060 = vrcp.pop %v1059
        %v1061 = vmul.f32 %v1056, %v1060
        %v1062 = vpack.c.bf16 %v1061, %v1061
        %1063 = vrot.lane.b32.xlu0 %v994, 64
        %v1064 = vpop.permute.xlu0 %1063
        %v1066 = vsel %vm1004, %v1062, 0
        %vm1068 = vcmask 1043456
        %v1070 = vsel %vm1068, %v1064, 0
        %1072 = vmatprep.subr.bf16.mxu0 0
        %1073 = vmatpush1.bf16.msra.mxu0 0
        %1074 = vmatprep.subr.bf16.mxu0 0
        %1075 = vmatpush1.bf16.msra.mxu0 0
        %1076 = vmatprep.subr.bf16.mxu0 0
        %1077 = vmatpush1.bf16.msra.mxu0 0
        %1078 = vmatprep.subr.bf16.mxu0 0
        %1079 = vmatpush1.bf16.msra.mxu0 0
        %1080 = vmatprep.subr.bf16.mxu0 0
        %1081 = vmatpush1.bf16.msra.mxu0 0
        %1082 = vmatprep.subr.bf16.mxu0 0
        %1083 = vmatpush1.bf16.msra.mxu0 0
        %1084 = vmatprep.subr.bf16.mxu0 0
        %1085 = vmatpush1.bf16.msra.mxu0 0
        %1086 = vmatprep.subr.bf16.mxu0 0
        %1087 = vmatpush1.bf16.msra.mxu0 %v1070
        %1088 = vmatprep.subr.bf16.mxu0 0
        %1089 = vmatpush2.bf16.msra.mxu0 0
        %1090 = vmatprep.subr.bf16.mxu0 0
        %1091 = vmatpush2.bf16.msra.mxu0 0
        %1092 = vmatprep.subr.bf16.mxu0 0
        %1093 = vmatpush2.bf16.msra.mxu0 0
        %1094 = vmatprep.subr.bf16.mxu0 0
        %1095 = vmatpush2.bf16.msra.mxu0 0
        %1096 = vmatprep.subr.bf16.mxu0 0
        %1097 = vmatpush2.bf16.msra.mxu0 0
        %1098 = vmatprep.subr.bf16.mxu0 0
        %1099 = vmatpush2.bf16.msra.mxu0 0
        %1100 = vmatprep.subr.bf16.mxu0 0
        %1101 = vmatpush2.bf16.msra.mxu0 0
        %1102 = vmatprep.subr.bf16.mxu0 0
        %1103 = vmatpush2.bf16.msra.mxu0 0
        %1104 = vmatprep.mubr.bf16.mxu0 0
        %1105 = vmatmul.mubr.bf16.gmra.mxu0 %v1066
        %v1106 = vpop.f32.mrf.mxu0
        %v1107 = vadd.f32 0.0, %v1106
        %v1108 = vpop.f32.mrf.mxu0
        %v1109 = vpop.f32.mrf.mxu0
        %v1110 = vpop.f32.mrf.mxu0
        %1111 = vdwg.mxu0
        %1112 = vrot.lane.b32.xlu0 %v994, 120
        %v1113 = vpop.permute.xlu0 %1112
        %1114 = vrot.lane.b32.xlu0 %v994, 88
        %v1115 = vpop.permute.xlu0 %1114
        %v1117 = vsel %vm1004, %v1113, 0
        %v1120 = vsel %vm1004, %v1115, 0
        %1122 = vmatprep.subr.bf16.mxu0 0
        %1123 = vmatpush1.bf16.xpose.msra.mxu0 0
        %1124 = vmatprep.subr.bf16.mxu0 0
        %1125 = vmatpush1.bf16.xpose.msra.mxu0 0
        %1126 = vmatprep.subr.bf16.mxu0 0
        %1127 = vmatpush1.bf16.xpose.msra.mxu0 0
        %1128 = vmatprep.subr.bf16.mxu0 0
        %1129 = vmatpush1.bf16.xpose.msra.mxu0 0
        %1130 = vmatprep.subr.bf16.mxu0 0
        %1131 = vmatpush1.bf16.xpose.msra.mxu0 0
        %1132 = vmatprep.subr.bf16.mxu0 0
        %1133 = vmatpush1.bf16.xpose.msra.mxu0 0
        %1134 = vmatprep.subr.bf16.mxu0 0
        %1135 = vmatpush1.bf16.xpose.msra.mxu0 0
        %1136 = vmatprep.subr.bf16.mxu0 0
        %1137 = vmatpush1.bf16.xpose.msra.mxu0 %v1120
        %1138 = vmatprep.subr.bf16.mxu0 0
        %1139 = vmatpush2.bf16.xpose.msra.mxu0 0
        %1140 = vmatprep.subr.bf16.mxu0 0
        %1141 = vmatpush2.bf16.xpose.msra.mxu0 0
        %1142 = vmatprep.subr.bf16.mxu0 0
        %1143 = vmatpush2.bf16.xpose.msra.mxu0 0
        %1144 = vmatprep.subr.bf16.mxu0 0
        %1145 = vmatpush2.bf16.xpose.msra.mxu0 0
        %1146 = vmatprep.subr.bf16.mxu0 0
        %1147 = vmatpush2.bf16.xpose.msra.mxu0 0
        %1148 = vmatprep.subr.bf16.mxu0 0
        %1149 = vmatpush2.bf16.xpose.msra.mxu0 0
        %1150 = vmatprep.subr.bf16.mxu0 0
        %1151 = vmatpush2.bf16.xpose.msra.mxu0 0
        %1152 = vmatprep.subr.bf16.mxu0 0
        %1153 = vmatpush2.bf16.xpose.msra.mxu0 0
        %1154 = vmatprep.mubr.bf16.mxu0 0
        %1155 = vmatmul.mubr.bf16.gmra.mxu0 %v1117
        %v1156 = vpop.f32.mrf.mxu0
        %v1157 = vadd.f32 %v999, %v1156
        %v1158 = vpop.f32.mrf.mxu0
        %v1159 = vpop.f32.mrf.mxu0
        %v1160 = vpop.f32.mrf.mxu0
        %1161 = vdwg.mxu0
        %v1162 = vsel %vm1004, %v1157, -inf
        %1163 = vmax.xlane.f32.xlu0 %v1162
        %v1164 = vpop.xlane.xlu0 %1163
        %v1165 = vsub.f32 %v1157, %v1164
        %v1166 = vmul.f32 %v1165, 1.442695
        %v1167 = vpow.pop %v1166
        %v1168 = vsel %vm1004, %v1167, 0.0
        %1169 = vadd.xlane.f32.xlu0 %v1168
        %v1170 = vpop.xlane.xlu0 %1169
        %v1171 = vrcp.pop %v1170
        %v1172 = vmul.f32 %v1167, %v1171
        %v1173 = vpack.c.bf16 %v1172, %v1172
        %1174 = vrot.lane.b32.xlu0 %v994, 56
        %v1175 = vpop.permute.xlu0 %1174
        %v1177 = vsel %vm1004, %v1173, 0
        %v1180 = vsel %vm1068, %v1175, 0
        %1182 = vmatprep.subr.bf16.mxu0 0
        %1183 = vmatpush1.bf16.msra.mxu0 0
        %1184 = vmatprep.subr.bf16.mxu0 0
        %1185 = vmatpush1.bf16.msra.mxu0 0
        %1186 = vmatprep.subr.bf16.mxu0 0
        %1187 = vmatpush1.bf16.msra.mxu0 0
        %1188 = vmatprep.subr.bf16.mxu0 0
        %1189 = vmatpush1.bf16.msra.mxu0 0
        %1190 = vmatprep.subr.bf16.mxu0 0
        %1191 = vmatpush1.bf16.msra.mxu0 0
        %1192 = vmatprep.subr.bf16.mxu0 0
        %1193 = vmatpush1.bf16.msra.mxu0 0
        %1194 = vmatprep.subr.bf16.mxu0 0
        %1195 = vmatpush1.bf16.msra.mxu0 0
        %1196 = vmatprep.subr.bf16.mxu0 0
        %1197 = vmatpush1.bf16.msra.mxu0 %v1180
        %1198 = vmatprep.subr.bf16.mxu0 0
        %1199 = vmatpush2.bf16.msra.mxu0 0
        %1200 = vmatprep.subr.bf16.mxu0 0
        %1201 = vmatpush2.bf16.msra.mxu0 0
        %1202 = vmatprep.subr.bf16.mxu0 0
        %1203 = vmatpush2.bf16.msra.mxu0 0
        %1204 = vmatprep.subr.bf16.mxu0 0
        %1205 = vmatpush2.bf16.msra.mxu0 0
        %1206 = vmatprep.subr.bf16.mxu0 0
        %1207 = vmatpush2.bf16.msra.mxu0 0
        %1208 = vmatprep.subr.bf16.mxu0 0
        %1209 = vmatpush2.bf16.msra.mxu0 0
        %1210 = vmatprep.subr.bf16.mxu0 0
        %1211 = vmatpush2.bf16.msra.mxu0 0
        %1212 = vmatprep.subr.bf16.mxu0 0
        %1213 = vmatpush2.bf16.msra.mxu0 0
        %1214 = vmatprep.mubr.bf16.mxu0 0
        %1215 = vmatmul.mubr.bf16.gmra.mxu0 %v1177
        %v1216 = vpop.f32.mrf.mxu0
        %v1217 = vadd.f32 0.0, %v1216
        %v1218 = vpop.f32.mrf.mxu0
        %v1219 = vpop.f32.mrf.mxu0
        %v1220 = vpop.f32.mrf.mxu0
        %1221 = vdwg.mxu0
        %1222 = vrot.lane.b32.xlu0 %v994, 112
        %v1223 = vpop.permute.xlu0 %1222
        %1224 = vrot.lane.b32.xlu0 %v994, 80
        %v1225 = vpop.permute.xlu0 %1224
        %v1227 = vsel %vm1004, %v1223, 0
        %v1230 = vsel %vm1004, %v1225, 0
        %1232 = vmatprep.subr.bf16.mxu0 0
        %1233 = vmatpush1.bf16.xpose.msra.mxu0 0
        %1234 = vmatprep.subr.bf16.mxu0 0
        %1235 = vmatpush1.bf16.xpose.msra.mxu0 0
        %1236 = vmatprep.subr.bf16.mxu0 0
        %1237 = vmatpush1.bf16.xpose.msra.mxu0 0
        %1238 = vmatprep.subr.bf16.mxu0 0
        %1239 = vmatpush1.bf16.xpose.msra.mxu0 0
        %1240 = vmatprep.subr.bf16.mxu0 0
        %1241 = vmatpush1.bf16.xpose.msra.mxu0 0
        %1242 = vmatprep.subr.bf16.mxu0 0
        %1243 = vmatpush1.bf16.xpose.msra.mxu0 0
        %1244 = vmatprep.subr.bf16.mxu0 0
        %1245 = vmatpush1.bf16.xpose.msra.mxu0 0
        %1246 = vmatprep.subr.bf16.mxu0 0
        %1247 = vmatpush1.bf16.xpose.msra.mxu0 %v1230
        %1248 = vmatprep.subr.bf16.mxu0 0
        %1249 = vmatpush2.bf16.xpose.msra.mxu0 0
        %1250 = vmatprep.subr.bf16.mxu0 0
        %1251 = vmatpush2.bf16.xpose.msra.mxu0 0
        %1252 = vmatprep.subr.bf16.mxu0 0
        %1253 = vmatpush2.bf16.xpose.msra.mxu0 0
        %1254 = vmatprep.subr.bf16.mxu0 0
        %1255 = vmatpush2.bf16.xpose.msra.mxu0 0
        %1256 = vmatprep.subr.bf16.mxu0 0
        %1257 = vmatpush2.bf16.xpose.msra.mxu0 0
        %1258 = vmatprep.subr.bf16.mxu0 0
        %1259 = vmatpush2.bf16.xpose.msra.mxu0 0
        %1260 = vmatprep.subr.bf16.mxu0 0
        %1261 = vmatpush2.bf16.xpose.msra.mxu0 0
        %1262 = vmatprep.subr.bf16.mxu0 0
        %1263 = vmatpush2.bf16.xpose.msra.mxu0 0
        %1264 = vmatprep.mubr.bf16.mxu0 0
        %1265 = vmatmul.mubr.bf16.gmra.mxu0 %v1227
        %v1266 = vpop.f32.mrf.mxu0
        %v1267 = vadd.f32 %v999, %v1266
        %v1268 = vpop.f32.mrf.mxu0
        %v1269 = vpop.f32.mrf.mxu0
        %v1270 = vpop.f32.mrf.mxu0
        %1271 = vdwg.mxu0
        %v1272 = vsel %vm1004, %v1267, -inf
        %1273 = vmax.xlane.f32.xlu0 %v1272
        %v1274 = vpop.xlane.xlu0 %1273
        %v1275 = vsub.f32 %v1267, %v1274
        %v1276 = vmul.f32 %v1275, 1.442695
        %v1277 = vpow.pop %v1276
        %v1278 = vsel %vm1004, %v1277, 0.0
        %1279 = vadd.xlane.f32.xlu0 %v1278
        %v1280 = vpop.xlane.xlu0 %1279
        %v1281 = vrcp.pop %v1280
        %v1282 = vmul.f32 %v1277, %v1281
        %v1283 = vpack.c.bf16 %v1282, %v1282
        %1284 = vrot.lane.b32.xlu0 %v994, 48
        %v1285 = vpop.permute.xlu0 %1284
        %v1287 = vsel %vm1004, %v1283, 0
        %v1290 = vsel %vm1068, %v1285, 0
        %1292 = vmatprep.subr.bf16.mxu0 0
        %1293 = vmatpush1.bf16.msra.mxu0 0
        %1294 = vmatprep.subr.bf16.mxu0 0
        %1295 = vmatpush1.bf16.msra.mxu0 0
        %1296 = vmatprep.subr.bf16.mxu0 0
        %1297 = vmatpush1.bf16.msra.mxu0 0
        %1298 = vmatprep.subr.bf16.mxu0 0
        %1299 = vmatpush1.bf16.msra.mxu0 0
        %1300 = vmatprep.subr.bf16.mxu0 0
        %1301 = vmatpush1.bf16.msra.mxu0 0
        %1302 = vmatprep.subr.bf16.mxu0 0
        %1303 = vmatpush1.bf16.msra.mxu0 0
        %1304 = vmatprep.subr.bf16.mxu0 0
        %1305 = vmatpush1.bf16.msra.mxu0 0
        %1306 = vmatprep.subr.bf16.mxu0 0
        %1307 = vmatpush1.bf16.msra.mxu0 %v1290
        %1308 = vmatprep.subr.bf16.mxu0 0
        %1309 = vmatpush2.bf16.msra.mxu0 0
        %1310 = vmatprep.subr.bf16.mxu0 0
        %1311 = vmatpush2.bf16.msra.mxu0 0
        %1312 = vmatprep.subr.bf16.mxu0 0
        %1313 = vmatpush2.bf16.msra.mxu0 0
        %1314 = vmatprep.subr.bf16.mxu0 0
        %1315 = vmatpush2.bf16.msra.mxu0 0
        %1316 = vmatprep.subr.bf16.mxu0 0
        %1317 = vmatpush2.bf16.msra.mxu0 0
        %1318 = vmatprep.subr.bf16.mxu0 0
        %1319 = vmatpush2.bf16.msra.mxu0 0
        %1320 = vmatprep.subr.bf16.mxu0 0
        %1321 = vmatpush2.bf16.msra.mxu0 0
        %1322 = vmatprep.subr.bf16.mxu0 0
        %1323 = vmatpush2.bf16.msra.mxu0 0
        %1324 = vmatprep.mubr.bf16.mxu0 0
        %1325 = vmatmul.mubr.bf16.gmra.mxu0 %v1287
        %v1326 = vpop.f32.mrf.mxu0
        %v1327 = vadd.f32 0.0, %v1326
        %v1328 = vpop.f32.mrf.mxu0
        %v1329 = vpop.f32.mrf.mxu0
        %v1330 = vpop.f32.mrf.mxu0
        %1331 = vdwg.mxu0
        %1332 = vrot.lane.b32.xlu0 %v994, 104
        %v1333 = vpop.permute.xlu0 %1332
        %1334 = vrot.lane.b32.xlu0 %v994, 72
        %v1335 = vpop.permute.xlu0 %1334
        %v1337 = vsel %vm1004, %v1333, 0
        %v1340 = vsel %vm1004, %v1335, 0
        %1342 = vmatprep.subr.bf16.mxu0 0
        %1343 = vmatpush1.bf16.xpose.msra.mxu0 0
        %1344 = vmatprep.subr.bf16.mxu0 0
        %1345 = vmatpush1.bf16.xpose.msra.mxu0 0
        %1346 = vmatprep.subr.bf16.mxu0 0
        %1347 = vmatpush1.bf16.xpose.msra.mxu0 0
        %1348 = vmatprep.subr.bf16.mxu0 0
        %1349 = vmatpush1.bf16.xpose.msra.mxu0 0
        %1350 = vmatprep.subr.bf16.mxu0 0
        %1351 = vmatpush1.bf16.xpose.msra.mxu0 0
        %1352 = vmatprep.subr.bf16.mxu0 0
        %1353 = vmatpush1.bf16.xpose.msra.mxu0 0
        %1354 = vmatprep.subr.bf16.mxu0 0
        %1355 = vmatpush1.bf16.xpose.msra.mxu0 0
        %1356 = vmatprep.subr.bf16.mxu0 0
        %1357 = vmatpush1.bf16.xpose.msra.mxu0 %v1340
        %1358 = vmatprep.subr.bf16.mxu0 0
        %1359 = vmatpush2.bf16.xpose.msra.mxu0 0
        %1360 = vmatprep.subr.bf16.mxu0 0
        %1361 = vmatpush2.bf16.xpose.msra.mxu0 0
        %1362 = vmatprep.subr.bf16.mxu0 0
        %1363 = vmatpush2.bf16.xpose.msra.mxu0 0
        %1364 = vmatprep.subr.bf16.mxu0 0
        %1365 = vmatpush2.bf16.xpose.msra.mxu0 0
        %1366 = vmatprep.subr.bf16.mxu0 0
        %1367 = vmatpush2.bf16.xpose.msra.mxu0 0
        %1368 = vmatprep.subr.bf16.mxu0 0
        %1369 = vmatpush2.bf16.xpose.msra.mxu0 0
        %1370 = vmatprep.subr.bf16.mxu0 0
        %1371 = vmatpush2.bf16.xpose.msra.mxu0 0
        %1372 = vmatprep.subr.bf16.mxu0 0
        %1373 = vmatpush2.bf16.xpose.msra.mxu0 0
        %1374 = vmatprep.mubr.bf16.mxu0 0
        %1375 = vmatmul.mubr.bf16.gmra.mxu0 %v1337
        %v1376 = vpop.f32.mrf.mxu0
        %v1377 = vadd.f32 %v999, %v1376
        %v1378 = vpop.f32.mrf.mxu0
        %v1379 = vpop.f32.mrf.mxu0
        %v1380 = vpop.f32.mrf.mxu0
        %1381 = vdwg.mxu0
        %v1382 = vsel %vm1004, %v1377, -inf
        %1383 = vmax.xlane.f32.xlu0 %v1382
        %v1384 = vpop.xlane.xlu0 %1383
        %v1385 = vsub.f32 %v1377, %v1384
        %v1386 = vmul.f32 %v1385, 1.442695
        %v1387 = vpow.pop %v1386
        %v1388 = vsel %vm1004, %v1387, 0.0
        %1389 = vadd.xlane.f32.xlu0 %v1388
        %v1390 = vpop.xlane.xlu0 %1389
        %v1391 = vrcp.pop %v1390
        %v1392 = vmul.f32 %v1387, %v1391
        %v1393 = vpack.c.bf16 %v1392, %v1392
        %1394 = vrot.lane.b32.xlu0 %v994, 40
        %v1395 = vpop.permute.xlu0 %1394
        %v1397 = vsel %vm1004, %v1393, 0
        %v1400 = vsel %vm1068, %v1395, 0
        %1402 = vmatprep.subr.bf16.mxu0 0
        %1403 = vmatpush1.bf16.msra.mxu0 0
        %1404 = vmatprep.subr.bf16.mxu0 0
        %1405 = vmatpush1.bf16.msra.mxu0 0
        %1406 = vmatprep.subr.bf16.mxu0 0
        %1407 = vmatpush1.bf16.msra.mxu0 0
        %1408 = vmatprep.subr.bf16.mxu0 0
        %1409 = vmatpush1.bf16.msra.mxu0 0
        %1410 = vmatprep.subr.bf16.mxu0 0
        %1411 = vmatpush1.bf16.msra.mxu0 0
        %1412 = vmatprep.subr.bf16.mxu0 0
        %1413 = vmatpush1.bf16.msra.mxu0 0
        %1414 = vmatprep.subr.bf16.mxu0 0
        %1415 = vmatpush1.bf16.msra.mxu0 0
        %1416 = vmatprep.subr.bf16.mxu0 0
        %1417 = vmatpush1.bf16.msra.mxu0 %v1400
        %1418 = vmatprep.subr.bf16.mxu0 0
        %1419 = vmatpush2.bf16.msra.mxu0 0
        %1420 = vmatprep.subr.bf16.mxu0 0
        %1421 = vmatpush2.bf16.msra.mxu0 0
        %1422 = vmatprep.subr.bf16.mxu0 0
        %1423 = vmatpush2.bf16.msra.mxu0 0
        %1424 = vmatprep.subr.bf16.mxu0 0
        %1425 = vmatpush2.bf16.msra.mxu0 0
        %1426 = vmatprep.subr.bf16.mxu0 0
        %1427 = vmatpush2.bf16.msra.mxu0 0
        %1428 = vmatprep.subr.bf16.mxu0 0
        %1429 = vmatpush2.bf16.msra.mxu0 0
        %1430 = vmatprep.subr.bf16.mxu0 0
        %1431 = vmatpush2.bf16.msra.mxu0 0
        %1432 = vmatprep.subr.bf16.mxu0 0
        %1433 = vmatpush2.bf16.msra.mxu0 0
        %1434 = vmatprep.mubr.bf16.mxu0 0
        %1435 = vmatmul.mubr.bf16.gmra.mxu0 %v1397
        %v1436 = vpop.f32.mrf.mxu0
        %v1437 = vadd.f32 0.0, %v1436
        %v1438 = vpop.f32.mrf.mxu0
        %v1439 = vpop.f32.mrf.mxu0
        %v1440 = vpop.f32.mrf.mxu0
        %1441 = vdwg.mxu0
        %1443 = vrot.lane.b32.xlu0 %v1217, 8
        %v1444 = vpop.permute.xlu0 %1443
        %1447 = vrot.lane.b32.xlu0 %v1327, 16
        %v1448 = vpop.permute.xlu0 %1447
        %1451 = vrot.lane.b32.xlu0 %v1437, 24
        %v1452 = vpop.permute.xlu0 %1451
        %v1454 = vsel %vm1004, %v1107, %v1444
        %vm1455 = vcmask 130048
        %v1456 = vsel %vm1455, %v1454, %v1448
        %vm1457 = vcmask 195584
        %v1458 = vsel %vm1457, %v1456, %v1452
        %v1459 = vpack.c.bf16 %v1458, %v1458
        %v1460 = vld [vmem:[%s854] sm:$0xf]
        %v1461 = vld [vmem:[%s854 + $0x4] sm:$0xf]
        %v1462 = vld [vmem:[%s854 + $0x8] sm:$0xf]
        %v1463 = vld [vmem:[%s854 + $0xc] sm:$0xf]
        %v1464 = vld [vmem:[%s857] sm:$0x1]
        %v1466 = vlaneseq
        %v1467 = vshrl.u32 %v1466, 7
        %v1468 = vsub.s32 0, %v1467
        %v1469 = vrot.slane %v1464, %v1468
        %v1475 = vunpack.c.l.b16 %v1460
        %v1476 = vunpack.c.l.b16 %v1461
        %v1477 = vunpack.c.l.b16 %v1462
        %v1478 = vunpack.c.l.b16 %v1463
        %v1479 = vpack.c.b16 %v1476, %v1475
        %v1480 = vpack.c.b16 %v1478, %v1477
        %v1484 = vsel %vm950, %v1459, 0
        %1486 = vmatprep.subr.bf16.mxu0 0
        %1487 = vmatpush1.bf16.msra.mxu0 0
        %1488 = vmatprep.subr.bf16.mxu0 0
        %1489 = vmatpush1.bf16.msra.mxu0 0
        %1490 = vmatprep.subr.bf16.mxu0 0
        %1491 = vmatpush1.bf16.msra.mxu0 0
        %1492 = vmatprep.subr.bf16.mxu0 0
        %1493 = vmatpush1.bf16.msra.mxu0 0
        %1494 = vmatprep.subr.bf16.mxu0 0
        %1495 = vmatpush1.bf16.msra.mxu0 0
        %1496 = vmatprep.subr.bf16.mxu0 0
        %1497 = vmatpush1.bf16.msra.mxu0 0
        %1498 = vmatprep.subr.bf16.mxu0 0
        %1499 = vmatpush1.bf16.msra.mxu0 %v1480
        %1500 = vmatprep.subr.bf16.mxu0 0
        %1501 = vmatpush1.bf16.msra.mxu0 %v1479
        %1502 = vmatprep.subr.bf16.mxu0 0
        %1503 = vmatpush2.bf16.msra.mxu0 0
        %1504 = vmatprep.subr.bf16.mxu0 0
        %1505 = vmatpush2.bf16.msra.mxu0 0
        %1506 = vmatprep.subr.bf16.mxu0 0
        %1507 = vmatpush2.bf16.msra.mxu0 0
        %1508 = vmatprep.subr.bf16.mxu0 0
        %1509 = vmatpush2.bf16.msra.mxu0 0
        %1510 = vmatprep.subr.bf16.mxu0 0
        %1511 = vmatpush2.bf16.msra.mxu0 0
        %1512 = vmatprep.subr.bf16.mxu0 0
        %1513 = vmatpush2.bf16.msra.mxu0 0
        %1514 = vmatprep.subr.bf16.mxu0 0
        %1515 = vmatpush2.bf16.msra.mxu0 0
        %1516 = vmatprep.subr.bf16.mxu0 0
        %1517 = vmatpush2.bf16.msra.mxu0 0
        %1518 = vmatprep.mubr.bf16.mxu0 0
        %1519 = vmatmul.mubr.bf16.gmra.mxu0 %v1484
        %v1520 = vpop.f32.mrf.mxu0
        %v1521 = vadd.f32 %v1469, %v1520
        %v1522 = vpop.f32.mrf.mxu0
        %v1523 = vpop.f32.mrf.mxu0
        %v1524 = vpop.f32.mrf.mxu0
        %1525 = vdwg.mxu0
        %v1526 = vadd.f32 %v1521, %v924
        %v1527 = vld [vmem:[%s860] sm:$0x1]
        %v1528 = vld [vmem:[%s863] sm:$0x1]
        %v1529 = vsel %vm950, %v1526, 0.0
        %1530 = vadd.xlane.f32.xlu0 %v1529
        %v1531 = vpop.xlane.xlu0 %1530
        %v1532 = vrcp.pop 32.0
        %v1533 = vmul.f32 %v1531, %v1532
        %v1534 = vsub.f32 %v1526, %v1533
        %v1535 = vmul.f32 %v1534, %v1534
        %v1536 = vsel %vm950, %v1535, 0.0
        %1537 = vadd.xlane.f32.xlu0 %v1536
        %v1538 = vpop.xlane.xlu0 %1537
        %v1539 = vmul.f32 %v1538, %v1532
        %v1540 = vadd.f32 %v1539, 1e-12
        %v1541 = vrsqrt.pop %v1540
        %v1542 = vmul.f32 %v1534, %v1541
        %v1544 = vlaneseq
        %v1545 = vshrl.u32 %v1544, 7
        %v1546 = vsub.s32 0, %v1545
        %v1547 = vrot.slane %v1527, %v1546
        %v1549 = vmul.f32 %v1542, %v1547
        %v1551 = vlaneseq
        %v1552 = vshrl.u32 %v1551, 7
        %v1553 = vsub.s32 0, %v1552
        %v1554 = vrot.slane %v1528, %v1553
        %v1556 = vadd.f32 %v1549, %v1554
        %v1557 = vpack.c.bf16 %v1556, %v1556
        %v1558 = vld [vmem:[%s868] sm:$0xf]
        %v1559 = vld [vmem:[%s868 + $0x4] sm:$0xf]
        %v1560 = vld [vmem:[%s868 + $0x8] sm:$0xf]
        %v1561 = vld [vmem:[%s868 + $0xc] sm:$0xf]
        %v1562 = vld [vmem:[%s871] sm:$0x1]
        %v1564 = vlaneseq
        %v1565 = vshrl.u32 %v1564, 7
        %v1566 = vsub.s32 0, %v1565
        %v1567 = vrot.slane %v1562, %v1566
        %v1573 = vunpack.c.l.b16 %v1558
        %v1574 = vunpack.c.l.b16 %v1559
        %v1575 = vunpack.c.l.b16 %v1560
        %v1576 = vunpack.c.l.b16 %v1561
        %v1577 = vpack.c.b16 %v1574, %v1573
        %v1578 = vpack.c.b16 %v1576, %v1575
        %v1582 = vsel %vm950, %v1557, 0
        %1584 = vmatprep.subr.bf16.mxu0 0
        %1585 = vmatpush1.bf16.msra.mxu0 0
        %1586 = vmatprep.subr.bf16.mxu0 0
        %1587 = vmatpush1.bf16.msra.mxu0 0
        %1588 = vmatprep.subr.bf16.mxu0 0
        %1589 = vmatpush1.bf16.msra.mxu0 0
        %1590 = vmatprep.subr.bf16.mxu0 0
        %1591 = vmatpush1.bf16.msra.mxu0 0
        %1592 = vmatprep.subr.bf16.mxu0 0
        %1593 = vmatpush1.bf16.msra.mxu0 0
        %1594 = vmatprep.subr.bf16.mxu0 0
        %1595 = vmatpush1.bf16.msra.mxu0 0
        %1596 = vmatprep.subr.bf16.mxu0 0
        %1597 = vmatpush1.bf16.msra.mxu0 %v1578
        %1598 = vmatprep.subr.bf16.mxu0 0
        %1599 = vmatpush1.bf16.msra.mxu0 %v1577
        %1600 = vmatprep.subr.bf16.mxu0 0
        %1601 = vmatpush2.bf16.msra.mxu0 0
        %1602 = vmatprep.subr.bf16.mxu0 0
        %1603 = vmatpush2.bf16.msra.mxu0 0
        %1604 = vmatprep.subr.bf16.mxu0 0
        %1605 = vmatpush2.bf16.msra.mxu0 0
        %1606 = vmatprep.subr.bf16.mxu0 0
        %1607 = vmatpush2.bf16.msra.mxu0 0
        %1608 = vmatprep.subr.bf16.mxu0 0
        %1609 = vmatpush2.bf16.msra.mxu0 0
        %1610 = vmatprep.subr.bf16.mxu0 0
        %1611 = vmatpush2.bf16.msra.mxu0 0
        %1612 = vmatprep.subr.bf16.mxu0 0
        %1613 = vmatpush2.bf16.msra.mxu0 0
        %1614 = vmatprep.subr.bf16.mxu0 0
        %1615 = vmatpush2.bf16.msra.mxu0 0
        %1616 = vmatprep.mubr.bf16.mxu0 0
        %1617 = vmatmul.mubr.bf16.gmra.mxu0 %v1582
        %v1618 = vpop.f32.mrf.mxu0
        %v1619 = vadd.f32 %v1567, %v1618
        %v1620 = vpop.f32.mrf.mxu0
        %v1621 = vpop.f32.mrf.mxu0
        %v1622 = vpop.f32.mrf.mxu0
        %1623 = vdwg.mxu0
        %v1624 = vmul.f32 %v1619, %v1619
        %v1625 = vmul.f32 %v1619, %v1624
        %v1626 = vmul.f32 %v1625, 0.044715
        %v1627 = vadd.f32 %v1619, %v1626
        %v1628 = vmul.f32 %v1627, 0.7978846
        %v1629 = vtanh.pop %v1628
        %v1630 = vadd.f32 %v1629, 1.0
        %v1631 = vmul.f32 %v1630, 0.5
        %v1632 = vmul.f32 %v1619, %v1631
        %v1633 = vpack.c.bf16 %v1632, %v1632
        %v1634 = vld [vmem:[%s876] sm:$0xf]
        %v1635 = vld [vmem:[%s876 + $0x4] sm:$0xf]
        %v1636 = vld [vmem:[%s876 + $0x8] sm:$0xf]
        %v1637 = vld [vmem:[%s876 + $0xc] sm:$0xf]
        %v1638 = vld [vmem:[%s876 + $0x10] sm:$0xf]
        %v1639 = vld [vmem:[%s876 + $0x14] sm:$0xf]
        %v1640 = vld [vmem:[%s876 + $0x18] sm:$0xf]
        %v1641 = vld [vmem:[%s876 + $0x1c] sm:$0xf]
        %v1642 = vld [vmem:[%s879] sm:$0x1]
        %v1644 = vlaneseq
        %v1645 = vshrl.u32 %v1644, 7
        %v1646 = vsub.s32 0, %v1645
        %v1647 = vrot.slane %v1642, %v1646
        %v1657 = vunpack.c.l.b16 %v1634
        %v1658 = vunpack.c.l.b16 %v1635
        %v1659 = vunpack.c.l.b16 %v1636
        %v1660 = vunpack.c.l.b16 %v1637
        %v1661 = vunpack.c.l.b16 %v1638
        %v1662 = vunpack.c.l.b16 %v1639
        %v1663 = vunpack.c.l.b16 %v1640
        %v1664 = vunpack.c.l.b16 %v1641
        %v1665 = vpack.c.b16 %v1658, %v1657
        %v1666 = vpack.c.b16 %v1660, %v1659
        %v1667 = vpack.c.b16 %v1662, %v1661
        %v1668 = vpack.c.b16 %v1664, %v1663
        %vm1673 = vcmask 523264
        %v1675 = vsel %vm1673, %v1633, 0
        %1677 = vmatprep.subr.bf16.mxu0 0
        %1678 = vmatpush1.bf16.msra.mxu0 0
        %1679 = vmatprep.subr.bf16.mxu0 0
        %1680 = vmatpush1.bf16.msra.mxu0 0
        %1681 = vmatprep.subr.bf16.mxu0 0
        %1682 = vmatpush1.bf16.msra.mxu0 0
        %1683 = vmatprep.subr.bf16.mxu0 0
        %1684 = vmatpush1.bf16.msra.mxu0 0
        %1685 = vmatprep.subr.bf16.mxu0 0
        %1686 = vmatpush1.bf16.msra.mxu0 %v1668
        %1687 = vmatprep.subr.bf16.mxu0 0
        %1688 = vmatpush1.bf16.msra.mxu0 %v1667
        %1689 = vmatprep.subr.bf16.mxu0 0
        %1690 = vmatpush1.bf16.msra.mxu0 %v1666
        %1691 = vmatprep.subr.bf16.mxu0 0
        %1692 = vmatpush1.bf16.msra.mxu0 %v1665
        %1693 = vmatprep.subr.bf16.mxu0 0
        %1694 = vmatpush2.bf16.msra.mxu0 0
        %1695 = vmatprep.subr.bf16.mxu0 0
        %1696 = vmatpush2.bf16.msra.mxu0 0
        %1697 = vmatprep.subr.bf16.mxu0 0
        %1698 = vmatpush2.bf16.msra.mxu0 0
        %1699 = vmatprep.subr.bf16.mxu0 0
        %1700 = vmatpush2.bf16.msra.mxu0 0
        %1701 = vmatprep.subr.bf16.mxu0 0
        %1702 = vmatpush2.bf16.msra.mxu0 0
        %1703 = vmatprep.subr.bf16.mxu0 0
        %1704 = vmatpush2.bf16.msra.mxu0 0
        %1705 = vmatprep.subr.bf16.mxu0 0
        %1706 = vmatpush2.bf16.msra.mxu0 0
        %1707 = vmatprep.subr.bf16.mxu0 0
        %1708 = vmatpush2.bf16.msra.mxu0 0
        %1709 = vmatprep.mubr.bf16.mxu0 0
        %1710 = vmatmul.mubr.bf16.gmra.mxu0 %v1675
        %v1711 = vpop.f32.mrf.mxu0
        %v1712 = vadd.f32 %v1647, %v1711
        %v1713 = vpop.f32.mrf.mxu0
        %v1714 = vpop.f32.mrf.mxu0
        %v1715 = vpop.f32.mrf.mxu0
        %1716 = vdwg.mxu0
        %v1717 = vadd.f32 %v1712, %v1556
        %v1718 = vld [vmem:[%s882] sm:$0x1]
        %v1719 = vld [vmem:[%s885] sm:$0x1]
        %v1720 = vsel %vm950, %v1717, 0.0
        %1721 = vadd.xlane.f32.xlu0 %v1720
        %v1722 = vpop.xlane.xlu0 %1721
        %v1723 = vmul.f32 %v1722, %v1532
        %v1724 = vsub.f32 %v1717, %v1723
        %v1725 = vmul.f32 %v1724, %v1724
        %v1726 = vsel %vm950, %v1725, 0.0
        %1727 = vadd.xlane.f32.xlu0 %v1726
        %v1728 = vpop.xlane.xlu0 %1727
        %v1729 = vmul.f32 %v1728, %v1532
        %v1730 = vadd.f32 %v1729, 1e-12
        %v1731 = vrsqrt.pop %v1730
        %v1732 = vmul.f32 %v1724, %v1731
        %v1734 = vlaneseq
        %v1735 = vshrl.u32 %v1734, 7
        %v1736 = vsub.s32 0, %v1735
        %v1737 = vrot.slane %v1718, %v1736
        %v1739 = vmul.f32 %v1732, %v1737
        %v1741 = vlaneseq
        %v1742 = vshrl.u32 %v1741, 7
        %v1743 = vsub.s32 0, %v1742
        %v1744 = vrot.slane %v1719, %v1743
        %v1746 = vadd.f32 %v1739, %v1744
        %1747 = vst.msk [vmem:[#allocation2] sm:$0xff] %vm950, %v1746
        %p1748 = scmp.eq.s32.totalorder %s40, 1
        // Predicated region
        $region109: #{sbert_forward.1} parent=103 // pred_check
          %p1749 = pneg %p1748
        $region110: #{sbert_forward.1} parent=103 // pred_check_branch
          %1751 = sbr.rel (%p1749) target = $region112
        $region111: #{sbert_forward.1} parent=103 // pred_region
          %v1752 = vld [vmem:[%s841] sm:$0xff]
          %1754 = vset.pattern.permute.xlu0 0
          %1755 = vperm.xlu0 %1754, %v1752
          %v1756 = vpop.permute.xlu0 %1755
          %v1758 = vmul.f32 %v1746, %v1756
          %v1759 = vsel %vm950, %v1758, 0.0
          %v1760 = vrot.slane %v1759, 4
          %v1761 = vadd.f32 %v1759, %v1760
          %v1762 = vrot.slane %v1761, 2
          %v1763 = vadd.f32 %v1761, %v1762
          %v1764 = vrot.slane %v1763, 1
          %v1765 = vadd.f32 %v1763, %v1764
          %vm1766 = vcmask 7168
          %v1767 = vsel %vm1766, %v1752, 0.0
          %v1768 = vrot.slane %v1767, 4
          %v1769 = vadd.f32 %v1767, %v1768
          %v1770 = vrot.slane %v1769, 2
          %v1771 = vadd.f32 %v1769, %v1770
          %v1772 = vrot.slane %v1771, 1
          %v1773 = vadd.f32 %v1771, %v1772
          %v1774 = vmax.f32 %v1773, 1e-09
          %1776 = vset.pattern.permute.xlu0 0
          %1777 = vperm.xlu0 %1776, %v1774
          %v1778 = vpop.permute.xlu0 %1777
          %v1780 = vrcp.pop %v1778
          %v1781 = vmul.f32 %v1765, %v1780
          %v1782 = vpack.c.bf16 %v1781, %v1781
          %v1783 = vld [vmem:[%s17] sm:$0xf]
          %v1784 = vld [vmem:[%s17 + $0x4] sm:$0xf]
          %v1785 = vld [vmem:[%s17 + $0x8] sm:$0xf]
          %v1786 = vld [vmem:[%s17 + $0xc] sm:$0xf]
          %v1787 = vld [vmem:[%s18] sm:$0x1]
          %v1792 = vunpack.c.l.b16 %v1783
          %v1793 = vunpack.c.l.b16 %v1784
          %v1794 = vunpack.c.l.b16 %v1785
          %v1795 = vunpack.c.l.b16 %v1786
          %v1796 = vpack.c.b16 %v1793, %v1792
          %v1797 = vpack.c.b16 %v1795, %v1794
          %v1801 = vsel %vm950, %v1782, 0
          %1803 = vmatprep.subr.bf16.mxu0 0
          %1804 = vmatpush1.bf16.msra.mxu0 0
          %1805 = vmatprep.subr.bf16.mxu0 0
          %1806 = vmatpush1.bf16.msra.mxu0 0
          %1807 = vmatprep.subr.bf16.mxu0 0
          %1808 = vmatpush1.bf16.msra.mxu0 0
          %1809 = vmatprep.subr.bf16.mxu0 0
          %1810 = vmatpush1.bf16.msra.mxu0 0
          %1811 = vmatprep.subr.bf16.mxu0 0
          %1812 = vmatpush1.bf16.msra.mxu0 0
          %1813 = vmatprep.subr.bf16.mxu0 0
          %1814 = vmatpush1.bf16.msra.mxu0 0
          %1815 = vmatprep.subr.bf16.mxu0 0
          %1816 = vmatpush1.bf16.msra.mxu0 %v1797
          %1817 = vmatprep.subr.bf16.mxu0 0
          %1818 = vmatpush1.bf16.msra.mxu0 %v1796
          %1819 = vmatprep.subr.bf16.mxu0 0
          %1820 = vmatpush2.bf16.msra.mxu0 0
          %1821 = vmatprep.subr.bf16.mxu0 0
          %1822 = vmatpush2.bf16.msra.mxu0 0
          %1823 = vmatprep.subr.bf16.mxu0 0
          %1824 = vmatpush2.bf16.msra.mxu0 0
          %1825 = vmatprep.subr.bf16.mxu0 0
          %1826 = vmatpush2.bf16.msra.mxu0 0
          %1827 = vmatprep.subr.bf16.mxu0 0
          %1828 = vmatpush2.bf16.msra.mxu0 0
          %1829 = vmatprep.subr.bf16.mxu0 0
          %1830 = vmatpush2.bf16.msra.mxu0 0
          %1831 = vmatprep.subr.bf16.mxu0 0
          %1832 = vmatpush2.bf16.msra.mxu0 0
          %1833 = vmatprep.subr.bf16.mxu0 0
          %1834 = vmatpush2.bf16.msra.mxu0 0
          %1835 = vmatprep.mubr.bf16.mxu0 0
          %1836 = vmatmul.mubr.bf16.gmra.mxu0 %v1801
          %v1837 = vpop.f32.mrf.mxu0
          %v1838 = vadd.f32 %v1787, %v1837
          %v1839 = vpop.f32.mrf.mxu0
          %v1840 = vpop.f32.mrf.mxu0
          %v1841 = vpop.f32.mrf.mxu0
          %1842 = vdwg.mxu0
          %v1843 = vmax.f32 %v1838, 0.0
          %v1844 = vpack.c.bf16 %v1843, %v1843
          %v1845 = vld [vmem:[%s19] sm:$0xf]
          %v1846 = vld [vmem:[%s19 + $0x4] sm:$0xf]
          %v1847 = vld [vmem:[%s20] sm:$0x1]
          %v1850 = vunpack.c.l.b16 %v1845
          %v1851 = vunpack.c.l.b16 %v1846
          %v1852 = vpack.c.b16 %v1851, %v1850
          %v1855 = vsel %vm1455, %v1844, 0
          %1857 = vmatprep.subr.bf16.mxu0 0
          %1858 = vmatpush1.bf16.msra.mxu0 0
          %1859 = vmatprep.subr.bf16.mxu0 0
          %1860 = vmatpush1.bf16.msra.mxu0 0
          %1861 = vmatprep.subr.bf16.mxu0 0
          %1862 = vmatpush1.bf16.msra.mxu0 0
          %1863 = vmatprep.subr.bf16.mxu0 0
          %1864 = vmatpush1.bf16.msra.mxu0 0
          %1865 = vmatprep.subr.bf16.mxu0 0
          %1866 = vmatpush1.bf16.msra.mxu0 0
          %1867 = vmatprep.subr.bf16.mxu0 0
          %1868 = vmatpush1.bf16.msra.mxu0 0
          %1869 = vmatprep.subr.bf16.mxu0 0
          %1870 = vmatpush1.bf16.msra.mxu0 0
          %1871 = vmatprep.subr.bf16.mxu0 0
          %1872 = vmatpush1.bf16.msra.mxu0 %v1852
          %1873 = vmatprep.subr.bf16.mxu0 0
          %1874 = vmatpush2.bf16.msra.mxu0 0
          %1875 = vmatprep.subr.bf16.mxu0 0
          %1876 = vmatpush2.bf16.msra.mxu0 0
          %1877 = vmatprep.subr.bf16.mxu0 0
          %1878 = vmatpush2.bf16.msra.mxu0 0
          %1879 = vmatprep.subr.bf16.mxu0 0
          %1880 = vmatpush2.bf16.msra.mxu0 0
          %1881 = vmatprep.subr.bf16.mxu0 0
          %1882 = vmatpush2.bf16.msra.mxu0 0
          %1883 = vmatprep.subr.bf16.mxu0 0
          %1884 = vmatpush2.bf16.msra.mxu0 0
          %1885 = vmatprep.subr.bf16.mxu0 0
          %1886 = vmatpush2.bf16.msra.mxu0 0
          %1887 = vmatprep.subr.bf16.mxu0 0
          %1888 = vmatpush2.bf16.msra.mxu0 0
          %1889 = vmatprep.mubr.bf16.mxu0 0
          %1890 = vmatmul.mubr.bf16.gmra.mxu0 %v1855
          %v1891 = vpop.f32.mrf.mxu0
          %v1892 = vadd.f32 %v1847, %v1891
          %v1893 = vpop.f32.mrf.mxu0
          %v1894 = vpop.f32.mrf.mxu0
          %v1895 = vpop.f32.mrf.mxu0
          %1896 = vdwg.mxu0
          %vm1897 = vcmask 122880
          %1898 = vst.msk [vmem:[%s830] sm:$0x1] %vm1897, %v1892
        $region112: #{sbert_forward.1} parent=103 // pred_fallthru
          _
        %s1899 = sand.u32 %s571, 1
        %s1900 = scalar_lea.sflag [#allocation4], %s1899
        %s1901 = sand.u32 %s571, 1
        %s1902 = scalar_lea.vmem [#allocation3], %s1901
        // Predicated region
        $region113: #{sbert_forward.1} parent=103 // pred_check
          %p1903 = pneg %p581
        $region114: #{sbert_forward.1} parent=103 // pred_check_branch
          %1905 = sbr.rel (%p1903) target = $region116
        $region115: #{sbert_forward.1} parent=103 // pred_region
          %s1907 = ssub.s32 16, 16
          %1908 = vsyncadd %s1900, %s1907
          %s1909 = smul.addr %s39, 16
          %s1910 = scalar_lea.hbm %s21, %s1909
          %s1912 = sshll.u32 %s1902, 4
          %s1913 = int_to_ptr.vmem [resolvable:$true] %s1912
          %1915 = dma.vmem_to_hbm [thread:$0]  %s1913, 16, %s1910, %s1900
        $region116: #{sbert_forward.1} parent=103 // pred_fallthru
          _
      $region104: #{sbert_forward.1} parent=5 // pred_fallthru
        _
      %p1916 = scmp.le.s32.totalorder 2, %s30
      // Predicated region
      $region117: #{sbert_forward.1} parent=5 // pred_check
        %p1917 = pneg %p1916
      $region118: #{sbert_forward.1} parent=5 // pred_check_branch
        %1919 = sbr.rel (%p1917) target = $region120
      $region119: #{sbert_forward.1} parent=5 // pred_region
        %s1920 = ssub.s32 %s30, 2
        // Predicated region
        $region121: #{sbert_forward.1} parent=119 // pred_check
          %p1921 = pneg %p587
        $region122: #{sbert_forward.1} parent=119 // pred_check_branch
          %1923 = sbr.rel (%p1921) target = $region124
        $region123: #{sbert_forward.1} parent=119 // pred_region
          %s1924 = sand.u32 %s572, 1
          %s1925 = scalar_lea.sflag [#allocation4], %s1924
          %s1926 = sand.u32 %s572, 1
          %s1927 = scalar_lea.vmem [#allocation3], %s1926
          %1928 = dma.done %s1925, 16
        $region124: #{sbert_forward.1} parent=119 // pred_fallthru
          _
      $region120: #{sbert_forward.1} parent=5 // pred_fallthru
        _
    $region6: #{sbert_forward.1} parent=1 // loop_footer
      %s34 = sadd.s32 1, %s30
    $region7: #{sbert_forward.1} parent=1 // loop_footer_branch
      %29 = sbr.rel target = $region3
    $region8: #{sbert_forward.1} parent=1 // loop_exit
      _
    %1929 = vsyncpa [#allocation4], 1
    %s1930 = scalar_lea.sflag [#allocation4], 1
    %1931 = vsyncpa %s1930, 1

</llo_original>
